<compile_context>
chip_gen: v6e
topology: v6e:2x2x1
jax: 0.10.0
libtpu: 0.0.40
codegen_flags: <defaults>
</compile_context>

<pallas_src>
import numpy as np
import jax
import jax.numpy as jnp
from jax.experimental import pallas as pl
from jax.experimental.pallas import tpu as pltpu

B = 8                 # batch
N = 8                 # input_dim == n_nodes == number of predicted columns (output_dim = 1 each)
H1 = H2 = H3 = 64     # ma_hidden_dims = [64, 64, 64]


def _masked_ae_kernel(x_ref, p_ref, w_ref, w4_ref, xpred_ref, tsum_ref):
    x = x_ref[...]                              # (B, D) f32
    d = x.shape[1]
    n = xpred_ref.shape[1]
    k = w_ref.shape[1]                          # N*H (block-diag width)

    # Small f32 slab: rows 0:D = mask-folded W1, then flattened b1 / b2 / b3 / padded b4.
    w1eff = p_ref[0:d, :]                       # (D, N*H)
    b1 = p_ref[d:d + 1, :]                      # (1, N*H)
    b2 = p_ref[d + 1:d + 2, :]
    b3 = p_ref[d + 2:d + 3, :]
    b4 = p_ref[d + 3:d + 4, 0:n]                # (1, N)

    # Layer 1 (mask already folded into the weights): one full-lane-width MXU matmul.
    h = jnp.dot(x, w1eff, preferred_element_type=jnp.float32)                  # (B, N*H) f32
    h = jnp.maximum(h + b1, 0.0)

    # Layers 2 & 3: block-diagonal (N*H, N*H) bf16 weights, f32 accumulate.
    h = jnp.dot(h.astype(jnp.bfloat16), w_ref[0:k, :],
                preferred_element_type=jnp.float32)
    h = jnp.maximum(h + b2, 0.0)
    h = jnp.dot(h.astype(jnp.bfloat16), w_ref[k:2 * k, :],
                preferred_element_type=jnp.float32)
    h = jnp.maximum(h + b3, 0.0)

    # Head: (N*H, N) block layout emits logits (B, N) lane-dense directly.
    logits = jnp.dot(h.astype(jnp.bfloat16), w4_ref[...],
                     preferred_element_type=jnp.float32) + b4                  # (B, N)

    pred = jnp.exp(logits)                       # Poisson rate > 0
    xpred_ref[...] = pred

    # Per-element Poisson ELBO term X*log(pred) - pred == X*logits - pred (exact),
    # reduced in-kernel to a single scalar (XLU reduce; avoids a second output slab).
    term = x * logits - pred
    psum = jnp.sum(term, axis=1, keepdims=True)                                # (B, 1)
    tsum_ref[...] = jnp.sum(psum, axis=0, keepdims=True)                       # (1, 1)


@jax.jit
def forward(X, mask, W1, Wbig, W4blk, Brows):
    """Returns (X_pred, ELBO_loss) — same semantics as module.forward(X, compute_loss=True)."""
    n, d, h1 = W1.shape
    bsz = X.shape[0]

    # Fold the per-node parent mask into the first-layer weights (per-call, mask can change):
    # W1eff[d, n*H + h] = mask[d, n] * W1[n, d, h]
    W1eff = jnp.transpose(mask.T[:, :, None] * W1, (1, 0, 2)).reshape(d, n * h1)
    Psmall = jnp.concatenate([W1eff, Brows], axis=0)          # (D+4, N*H) f32, tiny

    X_pred, tsum = pl.pallas_call(
        _masked_ae_kernel,
        out_shape=(jax.ShapeDtypeStruct((bsz, n), jnp.float32),
                   jax.ShapeDtypeStruct((1, 1), jnp.float32)),
        in_specs=[
            pl.BlockSpec(memory_space=pltpu.MemorySpace.VMEM),   # X           (B, D)    f32
            pl.BlockSpec(memory_space=pltpu.MemorySpace.VMEM),   # Psmall      (D+4, NH) f32
            pl.BlockSpec(memory_space=pltpu.MemorySpace.VMEM),   # Wbig        (2NH, NH) bf16
            pl.BlockSpec(memory_space=pltpu.MemorySpace.VMEM),   # W4blk       (NH, N)   bf16
        ],
        out_specs=(
            pl.BlockSpec(memory_space=pltpu.MemorySpace.VMEM),   # X_pred      (B, N)
            pl.BlockSpec(memory_space=pltpu.MemorySpace.VMEM),   # sum of ELBO terms (1, 1)
        ),
    )(X, Psmall, Wbig, W4blk)

    # ELBO_loss = -mean(X*log(X_pred) - X_pred - lgamma(X+1)); lgamma + mean are trivial glue.
    elbo_loss = -(tsum[0, 0] / (bsz * n) - jnp.mean(jax.lax.lgamma(X + 1.0)))
    return X_pred, elbo_loss


def init_params(key):
    """Per-node MLP params (PyTorch-Linear-style uniform fan-in init), raw (unpacked)."""
    ks = jax.random.split(key, 8)

    def u(k, shape, fan_in):
        bound = 1.0 / np.sqrt(fan_in)
        return jax.random.uniform(k, shape, jnp.float32, -bound, bound)

    W1 = u(ks[0], (N, N, H1), N)
    b1 = u(ks[1], (N, H1), N)
    W2 = u(ks[2], (N, H1, H2), H1)
    b2 = u(ks[3], (N, H2), H1)
    W3 = u(ks[4], (N, H2, H3), H2)
    b3 = u(ks[5], (N, H3), H2)
    W4 = u(ks[6], (N, H3), H3)          # Linear(H3, 1) per node
    b4 = u(ks[7], (N,), H3)
    return (W1, b1, W2, b2, W3, b3, W4, b4)


def pack_params(params):
    """Build the block-diagonal / flattened parameter slabs used by the kernel (once, at init)."""
    W1, b1, W2, b2, W3, b3, W4, b4 = params
    n = W1.shape[0]
    eye = jnp.eye(n, dtype=jnp.float32)

    # Block-diagonal hidden layers: (N*H, N*H) with node i's weights on the diagonal block.
    W2blk = (eye[:, None, :, None] * W2[:, :, None, :]).reshape(n * H1, n * H2)
    W3blk = (eye[:, None, :, None] * W3[:, :, None, :]).reshape(n * H2, n * H3)
    Wbig = jnp.concatenate([W2blk, W3blk], axis=0).astype(jnp.bfloat16)   # (2*N*H, N*H)

    # Head: (N*H3, N), column i reads node i's hidden block.
    W4blk = (eye[:, None, :] * W4[:, :, None]).reshape(n * H3, n).astype(jnp.bfloat16)

    # Flattened biases; b4 zero-padded to the N*H lane width.
    b4pad = jnp.zeros((n * H1,), jnp.float32).at[:n].set(b4)
    Brows = jnp.stack([b1.reshape(-1), b2.reshape(-1), b3.reshape(-1), b4pad], axis=0)  # (4, N*H)
    return Wbig, W4blk, Brows


def ref_forward(X, mask, params):
    """Pure-JAX f32 reference matching the PyTorch per-node loop."""
    W1, b1, W2, b2, W3, b3, W4, b4 = params
    cols = []
    for i in range(N):
        xm = X * mask[:, i][None, :]
        h = jnp.maximum(xm @ W1[i] + b1[i], 0.0)
        h = jnp.maximum(h @ W2[i] + b2[i], 0.0)
        h = jnp.maximum(h @ W3[i] + b3[i], 0.0)
        logits = h @ W4[i][:, None] + b4[i]
        cols.append(jnp.exp(logits))
    X_pred = jnp.concatenate(cols, axis=1)
    loss = -jnp.mean(X * jnp.log(X_pred) - X_pred - jax.lax.lgamma(X + 1.0))
    return X_pred, loss


if __name__ == "__main__":
    key = jax.random.PRNGKey(0)
    kx, km, kp = jax.random.split(key, 3)

    # Poisson-style count data (the ELBO is a Poisson log-likelihood).
    X = jax.random.poisson(kx, 2.0, (B, N)).astype(jnp.float32)
    # A sampled {0,1} parent mask (as set by update_mask from the probabilistic DAG sampler).
    mask = jax.random.bernoulli(km, 0.5, (N, N)).astype(jnp.float32)

    params = init_params(kp)
    Wbig, W4blk, Brows = pack_params(params)

    X_pred, loss = forward(X, mask, params[0], Wbig, W4blk, Brows)
    jax.block_until_ready((X_pred, loss))

    X_pred_ref, loss_ref = ref_forward(X, mask, params)
    assert X_pred.shape == (B, N) and X_pred.dtype == jnp.float32
    assert np.allclose(np.asarray(X_pred), np.asarray(X_pred_ref), rtol=2e-2, atol=2e-2), "X_pred mismatch"
    assert np.allclose(float(loss), float(loss_ref), rtol=2e-2, atol=2e-2), "ELBO loss mismatch"

    print("KERNEL_OK")
</pallas_src>

<mosaic_0001>
module attributes {stable_mosaic.version = 11 : i64} {
  func.func @_masked_ae_kernel(%arg0: memref<8x8xf32, #tpu.memory_space<vmem>>, %arg1: memref<12x512xf32, #tpu.memory_space<vmem>>, %arg2: memref<1024x512xbf16, #tpu.memory_space<vmem>>, %arg3: memref<512x8xbf16, #tpu.memory_space<vmem>>, %arg4: memref<8x8xf32, #tpu.memory_space<vmem>>, %arg5: memref<1x1xf32, #tpu.memory_space<vmem>>) attributes {dimension_semantics = [], scalar_prefetch = 0 : i64, scratch_operands = 0 : i64, tpu.core_type = #tpu.core_type<tc>} {
    %c0 = arith.constant 0 : index
    %c0_0 = arith.constant 0 : index
    %0 = vector.load %arg0[%c0, %c0_0] : memref<8x8xf32, #tpu.memory_space<vmem>>, vector<8x8xf32>
    %c0_1 = arith.constant 0 : index
    %c0_2 = arith.constant 0 : index
    %1 = vector.load %arg1[%c0_1, %c0_2] : memref<12x512xf32, #tpu.memory_space<vmem>>, vector<8x512xf32>
    %c8 = arith.constant 8 : index
    %c0_3 = arith.constant 0 : index
    %2 = vector.load %arg1[%c8, %c0_3] : memref<12x512xf32, #tpu.memory_space<vmem>>, vector<1x512xf32>
    %c9 = arith.constant 9 : index
    %c0_4 = arith.constant 0 : index
    %3 = vector.load %arg1[%c9, %c0_4] : memref<12x512xf32, #tpu.memory_space<vmem>>, vector<1x512xf32>
    %c10 = arith.constant 10 : index
    %c0_5 = arith.constant 0 : index
    %4 = vector.load %arg1[%c10, %c0_5] : memref<12x512xf32, #tpu.memory_space<vmem>>, vector<1x512xf32>
    %c11 = arith.constant 11 : index
    %c0_6 = arith.constant 0 : index
    %5 = vector.load %arg1[%c11, %c0_6] : memref<12x512xf32, #tpu.memory_space<vmem>>, vector<1x8xf32>
    %cst = arith.constant dense<0.000000e+00> : vector<8x512xf32>
    %6 = tpu.matmul %0, %1, %cst {dimension_numbers = #tpu.dot_dimension_numbers<[1], [0], [0], [1], [0, 0, 1, 1], [], []>} : vector<8x8xf32>, vector<8x512xf32>, vector<8x512xf32> -> vector<8x512xf32>
    %7 = vector.broadcast %2 : vector<1x512xf32> to vector<8x512xf32>
    %8 = arith.addf %6, %7 : vector<8x512xf32>
    %cst_7 = arith.constant 0.000000e+00 : f32
    %9 = vector.broadcast %cst_7 : f32 to vector<8x512xf32>
    %10 = arith.maximumf %8, %9 : vector<8x512xf32>
    %11 = arith.truncf %10 : vector<8x512xf32> to vector<8x512xbf16>
    %c0_8 = arith.constant 0 : index
    %c0_9 = arith.constant 0 : index
    %12 = vector.load %arg2[%c0_8, %c0_9] : memref<1024x512xbf16, #tpu.memory_space<vmem>>, vector<512x512xbf16>
    %cst_10 = arith.constant dense<0.000000e+00> : vector<8x512xf32>
    %13 = tpu.matmul %11, %12, %cst_10 {dimension_numbers = #tpu.dot_dimension_numbers<[1], [0], [0], [1], [0, 0, 1, 1], [], []>} : vector<8x512xbf16>, vector<512x512xbf16>, vector<8x512xf32> -> vector<8x512xf32>
    %14 = vector.broadcast %3 : vector<1x512xf32> to vector<8x512xf32>
    %15 = arith.addf %13, %14 : vector<8x512xf32>
    %cst_11 = arith.constant 0.000000e+00 : f32
    %16 = vector.broadcast %cst_11 : f32 to vector<8x512xf32>
    %17 = arith.maximumf %15, %16 : vector<8x512xf32>
    %18 = arith.truncf %17 : vector<8x512xf32> to vector<8x512xbf16>
    %c512 = arith.constant 512 : index
    %c0_12 = arith.constant 0 : index
    %19 = vector.load %arg2[%c512, %c0_12] : memref<1024x512xbf16, #tpu.memory_space<vmem>>, vector<512x512xbf16>
    %cst_13 = arith.constant dense<0.000000e+00> : vector<8x512xf32>
    %20 = tpu.matmul %18, %19, %cst_13 {dimension_numbers = #tpu.dot_dimension_numbers<[1], [0], [0], [1], [0, 0, 1, 1], [], []>} : vector<8x512xbf16>, vector<512x512xbf16>, vector<8x512xf32> -> vector<8x512xf32>
    %21 = vector.broadcast %4 : vector<1x512xf32> to vector<8x512xf32>
    %22 = arith.addf %20, %21 : vector<8x512xf32>
    %cst_14 = arith.constant 0.000000e+00 : f32
    %23 = vector.broadcast %cst_14 : f32 to vector<8x512xf32>
    %24 = arith.maximumf %22, %23 : vector<8x512xf32>
    %25 = arith.truncf %24 : vector<8x512xf32> to vector<8x512xbf16>
    %c0_15 = arith.constant 0 : index
    %c0_16 = arith.constant 0 : index
    %26 = vector.load %arg3[%c0_15, %c0_16] : memref<512x8xbf16, #tpu.memory_space<vmem>>, vector<512x8xbf16>
    %cst_17 = arith.constant dense<0.000000e+00> : vector<8x8xf32>
    %27 = tpu.matmul %25, %26, %cst_17 {dimension_numbers = #tpu.dot_dimension_numbers<[1], [0], [0], [1], [0, 0, 1, 1], [], []>} : vector<8x512xbf16>, vector<512x8xbf16>, vector<8x8xf32> -> vector<8x8xf32>
    %28 = vector.broadcast %5 : vector<1x8xf32> to vector<8x8xf32>
    %29 = arith.addf %27, %28 : vector<8x8xf32>
    %30 = math.exp %29 : vector<8x8xf32>
    %c0_18 = arith.constant 0 : index
    %c0_19 = arith.constant 0 : index
    %31 = vector.load %arg4[%c0_18, %c0_19] : memref<8x8xf32, #tpu.memory_space<vmem>>, vector<8x8xf32>
    tpu.vector_store %arg4[%c0_18, %c0_19], %30 {strides = array<i32>} : memref<8x8xf32, #tpu.memory_space<vmem>>, vector<8x8xf32>,
    %32 = arith.mulf %0, %29 : vector<8x8xf32>
    %33 = arith.subf %32, %30 : vector<8x8xf32>
    %cst_20 = arith.constant dense<0.000000e+00> : vector<8xf32>
    %34 = vector.multi_reduction <add>, %33, %cst_20 [1] : vector<8x8xf32> to vector<8xf32>
    %35 = vector.shape_cast %34 : vector<8xf32> to vector<8x1xf32>
    %cst_21 = arith.constant dense<0.000000e+00> : vector<1xf32>
    %36 = vector.multi_reduction <add>, %35, %cst_21 [0] : vector<8x1xf32> to vector<1xf32>
    %37 = vector.shape_cast %36 : vector<1xf32> to vector<1x1xf32>
    %c0_22 = arith.constant 0 : index
    %c0_23 = arith.constant 0 : index
    %38 = vector.load %arg5[%c0_22, %c0_23] : memref<1x1xf32, #tpu.memory_space<vmem>>, vector<1x1xf32>
    tpu.vector_store %arg5[%c0_22, %c0_23], %37 {strides = array<i32>} : memref<1x1xf32, #tpu.memory_space<vmem>>, vector<1x1xf32>,
    return
  }
}

</mosaic_0001>

<llo_original>
// kernel: forward.1
$region0: #{forward.1}
  #allocation0 [shape = 'u32[]', space=smem, size = 0x4, offset = 0x4, fixed_abs, tag = 'smem constant byte address 0x4 - core index']
  #allocation1 [shape = 'u32[144,128]{1,0:T(1,128)}', space=vmem, size = 0x12000, scoped, tag = 'internal scratch']
  %s0 = inlined_call_operand.vmem [shape: f32[8,8], index: 0, kind: input, shape index: {}]
  %s1 = inlined_call_operand.vmem [shape: f32[12,512], index: 1, kind: input, shape index: {}]
  %s2 = inlined_call_operand.hbm [shape: bf16[1024,512], index: 2, kind: input, shape index: {}]
  %s3 = inlined_call_operand.vmem [shape: bf16[512,8], index: 3, kind: input, shape index: {}]
  %s4 = inlined_call_operand.hbm [shape: f32[8,8], index: 4, kind: output, shape index: {0}]
  %s5 = inlined_call_operand.hbm [shape: f32[1,1], index: 5, kind: output, shape index: {1}]
  %6 = xla_tuple %s4, %s5
  %s7 = sld [smem:[#allocation0]]
  $region38: #{forward.1} parent=0
    _
  %s9 = ssub.s32 1, %s7
  %s10 = scalar_select 0, %s9, %s7
  $region1: #{forward.1} parent=0
    #allocation2 [shape = 'u8[1048576]{0}', space=vmem, size = 0x100000, scoped, tag = 'input window, operand 2, single buffered']
    #allocation3 [shape = 's32[1]{0}', space=sflag, size = 0x4, scoped, tag = 'scoped memory for forward.1']
    #allocation4 [shape = 's32[1]{0}', space=sflag, size = 0x4, scoped, tag = 'scoped memory for forward.1']
    #allocation5 [shape = 'u8[4096]{0}', space=vmem, size = 0x1000, scoped, tag = 'output window, operand 0, single buffered']
    #allocation6 [shape = 'u8[512]{0}', space=vmem, size = 0x400, scoped, tag = 'output window, operand 1, single buffered']
    #allocation7 [shape = 's32[1]{0}', space=sflag, size = 0x4, scoped, tag = 'scoped memory for forward.1']
    %11 = vsyncpa [#allocation3], 0
    %12 = vsyncpa [#allocation4], 0
    %13 = vsyncpa [#allocation7], 0
    // Predicated region
    $region2: #{forward.1} parent=1 // pred_check
      _
    $region3: #{forward.1} parent=1 // pred_check_branch
      %15 = sbr.rel (0) target = $region5
    $region4: #{forward.1} parent=1 // pred_region
      _
    $region5: #{forward.1} parent=1 // pred_fallthru
      _
    // Predicated region
    $region6: #{forward.1} parent=1 // pred_check
      _
    $region7: #{forward.1} parent=1 // pred_check_branch
      %17 = sbr.rel (0) target = $region9
    $region8: #{forward.1} parent=1 // pred_region
      _
    $region9: #{forward.1} parent=1 // pred_fallthru
      _
    // Predicated region
    $region10: #{forward.1} parent=1 // pred_check
      _
    $region11: #{forward.1} parent=1 // pred_check_branch
      %19 = sbr.rel (0) target = $region13
    $region12: #{forward.1} parent=1 // pred_region
      %s21 = ssub.s32 32768, 32768
      %22 = vsyncadd [#allocation3], %s21
      %s23 = sshll.u32 [#allocation2], 4
      %s24 = int_to_ptr.vmem [resolvable:$true] %s23
      %29 = dma.hbm_to_vmem [thread:$0]  %s2, 32768, %s24, [#allocation3], 256, 256, 16
    $region13: #{forward.1} parent=1 // pred_fallthru
      _
    // Predicated region
    $region14: #{forward.1} parent=1 // pred_check
      _
    $region15: #{forward.1} parent=1 // pred_check_branch
      %31 = sbr.rel (0) target = $region17
    $region16: #{forward.1} parent=1 // pred_region
      _
    $region17: #{forward.1} parent=1 // pred_fallthru
      _
    // Predicated region
    $region18: #{forward.1} parent=1 // pred_check
      _
    $region19: #{forward.1} parent=1 // pred_check_branch
      %33 = sbr.rel (0) target = $region21
    $region20: #{forward.1} parent=1 // pred_region
      %34 = dma.done [#allocation3], 32768
    $region21: #{forward.1} parent=1 // pred_fallthru
      _
    %v36 = vld [vmem:[%s0] sm:$0xff]
    %v37 = vld [vmem:[%s1] sm:$0xff]
    %v38 = vld [vmem:[%s1 + $0x8] sm:$0xff]
    %v39 = vld [vmem:[%s1 + $0x10] sm:$0xff]
    %v40 = vld [vmem:[%s1 + $0x18] sm:$0xff]
    %s41 = scalar_lea.vmem %s1, 32
    %v42 = vld [vmem:[%s41] ss:$8 sm:$0xf]
    %s43 = scalar_lea.vmem %s1, 33
    %v44 = vld [vmem:[%s43] ss:$8 sm:$0xf]
    %s45 = scalar_lea.vmem %s1, 34
    %v46 = vld [vmem:[%s45] ss:$8 sm:$0xf]
    %v47 = vld [vmem:[%s1 + $0x23] ss:$0 sm:$0xff]
    %v49 = vlaneseq
    %v50 = vshrl.u32 %v49, 7
    %v51 = vsub.s32 0, %v50
    %v52 = vrot.slane %v42, %v51
    %v53 = vlaneseq
    %v54 = vshrl.u32 %v53, 7
    %v55 = vsub.s32 1, %v54
    %v56 = vrot.slane %v42, %v55
    %v57 = vlaneseq
    %v58 = vshrl.u32 %v57, 7
    %v59 = vsub.s32 2, %v58
    %v60 = vrot.slane %v42, %v59
    %v61 = vlaneseq
    %v62 = vshrl.u32 %v61, 7
    %v63 = vsub.s32 3, %v62
    %v64 = vrot.slane %v42, %v63
    %vm69 = vcmask 64512
    %v71 = vsel %vm69, %v36, 0
    %73 = vmatprep.subr.mxu0 0.0
    %74 = vmatpush1.msra.mxu0 0.0
    %75 = vmatprep.subr.mxu0 0.0
    %76 = vmatpush1.msra.mxu0 0.0
    %77 = vmatprep.subr.mxu0 0.0
    %78 = vmatpush1.msra.mxu0 0.0
    %79 = vmatprep.subr.mxu0 0.0
    %80 = vmatpush1.msra.mxu0 0.0
    %81 = vmatprep.subr.mxu0 0.0
    %82 = vmatpush1.msra.mxu0 0.0
    %83 = vmatprep.subr.mxu0 0.0
    %84 = vmatpush1.msra.mxu0 0.0
    %85 = vmatprep.subr.mxu0 0.0
    %86 = vmatpush1.msra.mxu0 0.0
    %87 = vmatprep.subr.mxu0 0.0
    %88 = vmatpush1.msra.mxu0 0.0
    %89 = vmatprep.subr.mxu0 0.0
    %90 = vmatpush1.msra.mxu0 0.0
    %91 = vmatprep.subr.mxu0 0.0
    %92 = vmatpush1.msra.mxu0 0.0
    %93 = vmatprep.subr.mxu0 0.0
    %94 = vmatpush1.msra.mxu0 0.0
    %95 = vmatprep.subr.mxu0 0.0
    %96 = vmatpush1.msra.mxu0 0.0
    %97 = vmatprep.subr.mxu0 0.0
    %98 = vmatpush1.msra.mxu0 0.0
    %99 = vmatprep.subr.mxu0 0.0
    %100 = vmatpush1.msra.mxu0 0.0
    %101 = vmatprep.subr.mxu0 0.0
    %102 = vmatpush1.msra.mxu0 0.0
    %103 = vmatprep.subr.mxu0 %v38
    %104 = vmatpush1.msra.mxu0 %v37
    %105 = vmatprep.subr.mxu0 0.0
    %106 = vmatpush2.msra.mxu0 0.0
    %107 = vmatprep.subr.mxu0 0.0
    %108 = vmatpush2.msra.mxu0 0.0
    %109 = vmatprep.subr.mxu0 0.0
    %110 = vmatpush2.msra.mxu0 0.0
    %111 = vmatprep.subr.mxu0 0.0
    %112 = vmatpush2.msra.mxu0 0.0
    %113 = vmatprep.subr.mxu0 0.0
    %114 = vmatpush2.msra.mxu0 0.0
    %115 = vmatprep.subr.mxu0 0.0
    %116 = vmatpush2.msra.mxu0 0.0
    %117 = vmatprep.subr.mxu0 0.0
    %118 = vmatpush2.msra.mxu0 0.0
    %119 = vmatprep.subr.mxu0 0.0
    %120 = vmatpush2.msra.mxu0 0.0
    %121 = vmatprep.subr.mxu0 0.0
    %122 = vmatpush2.msra.mxu0 0.0
    %123 = vmatprep.subr.mxu0 0.0
    %124 = vmatpush2.msra.mxu0 0.0
    %125 = vmatprep.subr.mxu0 0.0
    %126 = vmatpush2.msra.mxu0 0.0
    %127 = vmatprep.subr.mxu0 0.0
    %128 = vmatpush2.msra.mxu0 0.0
    %129 = vmatprep.subr.mxu0 0.0
    %130 = vmatpush2.msra.mxu0 0.0
    %131 = vmatprep.subr.mxu0 0.0
    %132 = vmatpush2.msra.mxu0 0.0
    %133 = vmatprep.subr.mxu0 0.0
    %134 = vmatpush2.msra.mxu0 0.0
    %135 = vmatprep.subr.mxu0 0.0
    %136 = vmatpush2.msra.mxu0 0.0
    %137 = vmatprep.mubr.f32.mxu0 0.0
    %138 = vmatmul.mubr.f32.gmra.mxu0 %v71
    %v139 = vpop.f32.mrf.mxu0
    %v140 = vadd.f32 %v52, %v139
    %v141 = vpop.f32.mrf.mxu0
    %v142 = vadd.f32 %v56, %v141
    %143 = vdwg.mxu0
    %144 = vmatprep.subr.mxu0 0.0
    %145 = vmatpush1.msra.mxu0 0.0
    %146 = vmatprep.subr.mxu0 0.0
    %147 = vmatpush1.msra.mxu0 0.0
    %148 = vmatprep.subr.mxu0 0.0
    %149 = vmatpush1.msra.mxu0 0.0
    %150 = vmatprep.subr.mxu0 0.0
    %151 = vmatpush1.msra.mxu0 0.0
    %152 = vmatprep.subr.mxu0 0.0
    %153 = vmatpush1.msra.mxu0 0.0
    %154 = vmatprep.subr.mxu0 0.0
    %155 = vmatpush1.msra.mxu0 0.0
    %156 = vmatprep.subr.mxu0 0.0
    %157 = vmatpush1.msra.mxu0 0.0
    %158 = vmatprep.subr.mxu0 0.0
    %159 = vmatpush1.msra.mxu0 0.0
    %160 = vmatprep.subr.mxu0 0.0
    %161 = vmatpush1.msra.mxu0 0.0
    %162 = vmatprep.subr.mxu0 0.0
    %163 = vmatpush1.msra.mxu0 0.0
    %164 = vmatprep.subr.mxu0 0.0
    %165 = vmatpush1.msra.mxu0 0.0
    %166 = vmatprep.subr.mxu0 0.0
    %167 = vmatpush1.msra.mxu0 0.0
    %168 = vmatprep.subr.mxu0 0.0
    %169 = vmatpush1.msra.mxu0 0.0
    %170 = vmatprep.subr.mxu0 0.0
    %171 = vmatpush1.msra.mxu0 0.0
    %172 = vmatprep.subr.mxu0 0.0
    %173 = vmatpush1.msra.mxu0 0.0
    %174 = vmatprep.subr.mxu0 %v40
    %175 = vmatpush1.msra.mxu0 %v39
    %176 = vmatprep.subr.mxu0 0.0
    %177 = vmatpush2.msra.mxu0 0.0
    %178 = vmatprep.subr.mxu0 0.0
    %179 = vmatpush2.msra.mxu0 0.0
    %180 = vmatprep.subr.mxu0 0.0
    %181 = vmatpush2.msra.mxu0 0.0
    %182 = vmatprep.subr.mxu0 0.0
    %183 = vmatpush2.msra.mxu0 0.0
    %184 = vmatprep.subr.mxu0 0.0
    %185 = vmatpush2.msra.mxu0 0.0
    %186 = vmatprep.subr.mxu0 0.0
    %187 = vmatpush2.msra.mxu0 0.0
    %188 = vmatprep.subr.mxu0 0.0
    %189 = vmatpush2.msra.mxu0 0.0
    %190 = vmatprep.subr.mxu0 0.0
    %191 = vmatpush2.msra.mxu0 0.0
    %192 = vmatprep.subr.mxu0 0.0
    %193 = vmatpush2.msra.mxu0 0.0
    %194 = vmatprep.subr.mxu0 0.0
    %195 = vmatpush2.msra.mxu0 0.0
    %196 = vmatprep.subr.mxu0 0.0
    %197 = vmatpush2.msra.mxu0 0.0
    %198 = vmatprep.subr.mxu0 0.0
    %199 = vmatpush2.msra.mxu0 0.0
    %200 = vmatprep.subr.mxu0 0.0
    %201 = vmatpush2.msra.mxu0 0.0
    %202 = vmatprep.subr.mxu0 0.0
    %203 = vmatpush2.msra.mxu0 0.0
    %204 = vmatprep.subr.mxu0 0.0
    %205 = vmatpush2.msra.mxu0 0.0
    %206 = vmatprep.subr.mxu0 0.0
    %207 = vmatpush2.msra.mxu0 0.0
    %208 = vmatprep.mubr.f32.mxu0 0.0
    %209 = vmatmul.mubr.f32.gmra.mxu0 %v71
    %v210 = vpop.f32.mrf.mxu0
    %v211 = vadd.f32 %v60, %v210
    %v212 = vpop.f32.mrf.mxu0
    %v213 = vadd.f32 %v64, %v212
    %214 = vdwg.mxu0
    %v215 = vmax.f32 %v140, 0.0
    %v216 = vmax.f32 %v142, 0.0
    %v217 = vmax.f32 %v211, 0.0
    %v218 = vmax.f32 %v213, 0.0
    %v219 = vpack.c.bf16 %v215, %v215
    %v220 = vpack.c.bf16 %v216, %v216
    %v221 = vpack.c.bf16 %v217, %v217
    %v222 = vpack.c.bf16 %v218, %v218
    %v223 = vld [vmem:[#allocation2] sm:$0xff]
    %v224 = vld [vmem:[#allocation2 + $0x8] sm:$0xff]
    %v225 = vld [vmem:[#allocation2 + $0x10] sm:$0xff]
    %v226 = vld [vmem:[#allocation2 + $0x18] sm:$0xff]
    %v227 = vld [vmem:[#allocation2 + $0x20] sm:$0xff]
    %v228 = vld [vmem:[#allocation2 + $0x28] sm:$0xff]
    %v229 = vld [vmem:[#allocation2 + $0x30] sm:$0xff]
    %v230 = vld [vmem:[#allocation2 + $0x38] sm:$0xff]
    %v231 = vld [vmem:[#allocation2 + $0x40] sm:$0xff]
    %v232 = vld [vmem:[#allocation2 + $0x48] sm:$0xff]
    %v233 = vld [vmem:[#allocation2 + $0x50] sm:$0xff]
    %v234 = vld [vmem:[#allocation2 + $0x58] sm:$0xff]
    %v235 = vld [vmem:[#allocation2 + $0x60] sm:$0xff]
    %v236 = vld [vmem:[#allocation2 + $0x68] sm:$0xff]
    %v237 = vld [vmem:[#allocation2 + $0x70] sm:$0xff]
    %v238 = vld [vmem:[#allocation2 + $0x78] sm:$0xff]
    %v239 = vld [vmem:[#allocation2 + $0x80] sm:$0xff]
    %v240 = vld [vmem:[#allocation2 + $0x88] sm:$0xff]
    %v241 = vld [vmem:[#allocation2 + $0x90] sm:$0xff]
    %v242 = vld [vmem:[#allocation2 + $0x98] sm:$0xff]
    %v243 = vld [vmem:[#allocation2 + $0xa0] sm:$0xff]
    %v244 = vld [vmem:[#allocation2 + $0xa8] sm:$0xff]
    %v245 = vld [vmem:[#allocation2 + $0xb0] sm:$0xff]
    %v246 = vld [vmem:[#allocation2 + $0xb8] sm:$0xff]
    %v247 = vld [vmem:[#allocation2 + $0xc0] sm:$0xff]
    %v248 = vld [vmem:[#allocation2 + $0xc8] sm:$0xff]
    %v249 = vld [vmem:[#allocation2 + $0xd0] sm:$0xff]
    %v250 = vld [vmem:[#allocation2 + $0xd8] sm:$0xff]
    %v251 = vld [vmem:[#allocation2 + $0xe0] sm:$0xff]
    %v252 = vld [vmem:[#allocation2 + $0xe8] sm:$0xff]
    %v253 = vld [vmem:[#allocation2 + $0xf0] sm:$0xff]
    %v254 = vld [vmem:[#allocation2 + $0xf8] sm:$0xff]
    %v255 = vld [vmem:[#allocation2 + $0x100] sm:$0xff]
    %v256 = vld [vmem:[#allocation2 + $0x108] sm:$0xff]
    %v257 = vld [vmem:[#allocation2 + $0x110] sm:$0xff]
    %v258 = vld [vmem:[#allocation2 + $0x118] sm:$0xff]
    %v259 = vld [vmem:[#allocation2 + $0x120] sm:$0xff]
    %v260 = vld [vmem:[#allocation2 + $0x128] sm:$0xff]
    %v261 = vld [vmem:[#allocation2 + $0x130] sm:$0xff]
    %v262 = vld [vmem:[#allocation2 + $0x138] sm:$0xff]
    %v263 = vld [vmem:[#allocation2 + $0x140] sm:$0xff]
    %v264 = vld [vmem:[#allocation2 + $0x148] sm:$0xff]
    %v265 = vld [vmem:[#allocation2 + $0x150] sm:$0xff]
    %v266 = vld [vmem:[#allocation2 + $0x158] sm:$0xff]
    %v267 = vld [vmem:[#allocation2 + $0x160] sm:$0xff]
    %v268 = vld [vmem:[#allocation2 + $0x168] sm:$0xff]
    %v269 = vld [vmem:[#allocation2 + $0x170] sm:$0xff]
    %v270 = vld [vmem:[#allocation2 + $0x178] sm:$0xff]
    %v271 = vld [vmem:[#allocation2 + $0x180] sm:$0xff]
    %v272 = vld [vmem:[#allocation2 + $0x188] sm:$0xff]
    %v273 = vld [vmem:[#allocation2 + $0x190] sm:$0xff]
    %v274 = vld [vmem:[#allocation2 + $0x198] sm:$0xff]
    %v275 = vld [vmem:[#allocation2 + $0x1a0] sm:$0xff]
    %v276 = vld [vmem:[#allocation2 + $0x1a8] sm:$0xff]
    %v277 = vld [vmem:[#allocation2 + $0x1b0] sm:$0xff]
    %v278 = vld [vmem:[#allocation2 + $0x1b8] sm:$0xff]
    %v279 = vld [vmem:[#allocation2 + $0x1c0] sm:$0xff]
    %v280 = vld [vmem:[#allocation2 + $0x1c8] sm:$0xff]
    %v281 = vld [vmem:[#allocation2 + $0x1d0] sm:$0xff]
    %v282 = vld [vmem:[#allocation2 + $0x1d8] sm:$0xff]
    %v283 = vld [vmem:[#allocation2 + $0x1e0] sm:$0xff]
    %v284 = vld [vmem:[#allocation2 + $0x1e8] sm:$0xff]
    %v285 = vld [vmem:[#allocation2 + $0x1f0] sm:$0xff]
    %v286 = vld [vmem:[#allocation2 + $0x1f8] sm:$0xff]
    %v287 = vld [vmem:[#allocation2 + $0x200] sm:$0xff]
    %v288 = vld [vmem:[#allocation2 + $0x208] sm:$0xff]
    %v289 = vld [vmem:[#allocation2 + $0x210] sm:$0xff]
    %v290 = vld [vmem:[#allocation2 + $0x218] sm:$0xff]
    %v291 = vld [vmem:[#allocation2 + $0x220] sm:$0xff]
    %v292 = vld [vmem:[#allocation2 + $0x228] sm:$0xff]
    %v293 = vld [vmem:[#allocation2 + $0x230] sm:$0xff]
    %v294 = vld [vmem:[#allocation2 + $0x238] sm:$0xff]
    %v295 = vld [vmem:[#allocation2 + $0x240] sm:$0xff]
    %v296 = vld [vmem:[#allocation2 + $0x248] sm:$0xff]
    %v297 = vld [vmem:[#allocation2 + $0x250] sm:$0xff]
    %v298 = vld [vmem:[#allocation2 + $0x258] sm:$0xff]
    %v299 = vld [vmem:[#allocation2 + $0x260] sm:$0xff]
    %v300 = vld [vmem:[#allocation2 + $0x268] sm:$0xff]
    %v301 = vld [vmem:[#allocation2 + $0x270] sm:$0xff]
    %v302 = vld [vmem:[#allocation2 + $0x278] sm:$0xff]
    %v303 = vld [vmem:[#allocation2 + $0x280] sm:$0xff]
    %v304 = vld [vmem:[#allocation2 + $0x288] sm:$0xff]
    %v305 = vld [vmem:[#allocation2 + $0x290] sm:$0xff]
    %v306 = vld [vmem:[#allocation2 + $0x298] sm:$0xff]
    %v307 = vld [vmem:[#allocation2 + $0x2a0] sm:$0xff]
    %v308 = vld [vmem:[#allocation2 + $0x2a8] sm:$0xff]
    %v309 = vld [vmem:[#allocation2 + $0x2b0] sm:$0xff]
    %v310 = vld [vmem:[#allocation2 + $0x2b8] sm:$0xff]
    %v311 = vld [vmem:[#allocation2 + $0x2c0] sm:$0xff]
    %v312 = vld [vmem:[#allocation2 + $0x2c8] sm:$0xff]
    %v313 = vld [vmem:[#allocation2 + $0x2d0] sm:$0xff]
    %v314 = vld [vmem:[#allocation2 + $0x2d8] sm:$0xff]
    %v315 = vld [vmem:[#allocation2 + $0x2e0] sm:$0xff]
    %v316 = vld [vmem:[#allocation2 + $0x2e8] sm:$0xff]
    %v317 = vld [vmem:[#allocation2 + $0x2f0] sm:$0xff]
    %v318 = vld [vmem:[#allocation2 + $0x2f8] sm:$0xff]
    %v319 = vld [vmem:[#allocation2 + $0x300] sm:$0xff]
    %v320 = vld [vmem:[#allocation2 + $0x308] sm:$0xff]
    %v321 = vld [vmem:[#allocation2 + $0x310] sm:$0xff]
    %v322 = vld [vmem:[#allocation2 + $0x318] sm:$0xff]
    %v323 = vld [vmem:[#allocation2 + $0x320] sm:$0xff]
    %v324 = vld [vmem:[#allocation2 + $0x328] sm:$0xff]
    %v325 = vld [vmem:[#allocation2 + $0x330] sm:$0xff]
    %v326 = vld [vmem:[#allocation2 + $0x338] sm:$0xff]
    %v327 = vld [vmem:[#allocation2 + $0x340] sm:$0xff]
    %v328 = vld [vmem:[#allocation2 + $0x348] sm:$0xff]
    %v329 = vld [vmem:[#allocation2 + $0x350] sm:$0xff]
    %v330 = vld [vmem:[#allocation2 + $0x358] sm:$0xff]
    %v331 = vld [vmem:[#allocation2 + $0x360] sm:$0xff]
    %v332 = vld [vmem:[#allocation2 + $0x368] sm:$0xff]
    %v333 = vld [vmem:[#allocation2 + $0x370] sm:$0xff]
    %v334 = vld [vmem:[#allocation2 + $0x378] sm:$0xff]
    %v335 = vld [vmem:[#allocation2 + $0x380] sm:$0xff]
    %v336 = vld [vmem:[#allocation2 + $0x388] sm:$0xff]
    %v337 = vld [vmem:[#allocation2 + $0x390] sm:$0xff]
    %v338 = vld [vmem:[#allocation2 + $0x398] sm:$0xff]
    %v339 = vld [vmem:[#allocation2 + $0x3a0] sm:$0xff]
    %v340 = vld [vmem:[#allocation2 + $0x3a8] sm:$0xff]
    %v341 = vld [vmem:[#allocation2 + $0x3b0] sm:$0xff]
    %v342 = vld [vmem:[#allocation2 + $0x3b8] sm:$0xff]
    %v343 = vld [vmem:[#allocation2 + $0x3c0] sm:$0xff]
    %v344 = vld [vmem:[#allocation2 + $0x3c8] sm:$0xff]
    %v345 = vld [vmem:[#allocation2 + $0x3d0] sm:$0xff]
    %v346 = vld [vmem:[#allocation2 + $0x3d8] sm:$0xff]
    %v347 = vld [vmem:[#allocation2 + $0x3e0] sm:$0xff]
    %v348 = vld [vmem:[#allocation2 + $0x3e8] sm:$0xff]
    %v349 = vld [vmem:[#allocation2 + $0x3f0] sm:$0xff]
    %v350 = vld [vmem:[#allocation2 + $0x3f8] sm:$0xff]
    %v352 = vlaneseq
    %v353 = vshrl.u32 %v352, 7
    %v354 = vsub.s32 0, %v353
    %v355 = vrot.slane %v44, %v354
    %v356 = vlaneseq
    %v357 = vshrl.u32 %v356, 7
    %v358 = vsub.s32 1, %v357
    %v359 = vrot.slane %v44, %v358
    %v360 = vlaneseq
    %v361 = vshrl.u32 %v360, 7
    %v362 = vsub.s32 2, %v361
    %v363 = vrot.slane %v44, %v362
    %v364 = vlaneseq
    %v365 = vshrl.u32 %v364, 7
    %v366 = vsub.s32 3, %v365
    %v367 = vrot.slane %v44, %v366
    %v500 = vunpack.c.l.b16 %v223
    %v501 = vunpack.c.h.b16 %v223
    %v502 = vunpack.c.l.b16 %v224
    %v503 = vunpack.c.h.b16 %v224
    %v504 = vunpack.c.l.b16 %v225
    %v505 = vunpack.c.h.b16 %v225
    %v506 = vunpack.c.l.b16 %v226
    %v507 = vunpack.c.h.b16 %v226
    %v508 = vunpack.c.l.b16 %v227
    %v509 = vunpack.c.h.b16 %v227
    %v510 = vunpack.c.l.b16 %v228
    %v511 = vunpack.c.h.b16 %v228
    %v512 = vunpack.c.l.b16 %v229
    %v513 = vunpack.c.h.b16 %v229
    %v514 = vunpack.c.l.b16 %v230
    %v515 = vunpack.c.h.b16 %v230
    %v516 = vunpack.c.l.b16 %v231
    %v517 = vunpack.c.h.b16 %v231
    %v518 = vunpack.c.l.b16 %v232
    %v519 = vunpack.c.h.b16 %v232
    %v520 = vunpack.c.l.b16 %v233
    %v521 = vunpack.c.h.b16 %v233
    %v522 = vunpack.c.l.b16 %v234
    %v523 = vunpack.c.h.b16 %v234
    %v524 = vunpack.c.l.b16 %v235
    %v525 = vunpack.c.h.b16 %v235
    %v526 = vunpack.c.l.b16 %v236
    %v527 = vunpack.c.h.b16 %v236
    %v528 = vunpack.c.l.b16 %v237
    %v529 = vunpack.c.h.b16 %v237
    %v530 = vunpack.c.l.b16 %v238
    %v531 = vunpack.c.h.b16 %v238
    %v532 = vunpack.c.l.b16 %v239
    %v533 = vunpack.c.h.b16 %v239
    %v534 = vunpack.c.l.b16 %v240
    %v535 = vunpack.c.h.b16 %v240
    %v536 = vunpack.c.l.b16 %v241
    %v537 = vunpack.c.h.b16 %v241
    %v538 = vunpack.c.l.b16 %v242
    %v539 = vunpack.c.h.b16 %v242
    %v540 = vunpack.c.l.b16 %v243
    %v541 = vunpack.c.h.b16 %v243
    %v542 = vunpack.c.l.b16 %v244
    %v543 = vunpack.c.h.b16 %v244
    %v544 = vunpack.c.l.b16 %v245
    %v545 = vunpack.c.h.b16 %v245
    %v546 = vunpack.c.l.b16 %v246
    %v547 = vunpack.c.h.b16 %v246
    %v548 = vunpack.c.l.b16 %v247
    %v549 = vunpack.c.h.b16 %v247
    %v550 = vunpack.c.l.b16 %v248
    %v551 = vunpack.c.h.b16 %v248
    %v552 = vunpack.c.l.b16 %v249
    %v553 = vunpack.c.h.b16 %v249
    %v554 = vunpack.c.l.b16 %v250
    %v555 = vunpack.c.h.b16 %v250
    %v556 = vunpack.c.l.b16 %v251
    %v557 = vunpack.c.h.b16 %v251
    %v558 = vunpack.c.l.b16 %v252
    %v559 = vunpack.c.h.b16 %v252
    %v560 = vunpack.c.l.b16 %v253
    %v561 = vunpack.c.h.b16 %v253
    %v562 = vunpack.c.l.b16 %v254
    %v563 = vunpack.c.h.b16 %v254
    %v564 = vunpack.c.l.b16 %v255
    %v565 = vunpack.c.h.b16 %v255
    %v566 = vunpack.c.l.b16 %v256
    %v567 = vunpack.c.h.b16 %v256
    %v568 = vunpack.c.l.b16 %v257
    %v569 = vunpack.c.h.b16 %v257
    %v570 = vunpack.c.l.b16 %v258
    %v571 = vunpack.c.h.b16 %v258
    %v572 = vunpack.c.l.b16 %v259
    %v573 = vunpack.c.h.b16 %v259
    %v574 = vunpack.c.l.b16 %v260
    %v575 = vunpack.c.h.b16 %v260
    %v576 = vunpack.c.l.b16 %v261
    %v577 = vunpack.c.h.b16 %v261
    %v578 = vunpack.c.l.b16 %v262
    %v579 = vunpack.c.h.b16 %v262
    %v580 = vunpack.c.l.b16 %v263
    %v581 = vunpack.c.h.b16 %v263
    %v582 = vunpack.c.l.b16 %v264
    %v583 = vunpack.c.h.b16 %v264
    %v584 = vunpack.c.l.b16 %v265
    %v585 = vunpack.c.h.b16 %v265
    %v586 = vunpack.c.l.b16 %v266
    %v587 = vunpack.c.h.b16 %v266
    %v588 = vunpack.c.l.b16 %v267
    %v589 = vunpack.c.h.b16 %v267
    %v590 = vunpack.c.l.b16 %v268
    %v591 = vunpack.c.h.b16 %v268
    %v592 = vunpack.c.l.b16 %v269
    %v593 = vunpack.c.h.b16 %v269
    %v594 = vunpack.c.l.b16 %v270
    %v595 = vunpack.c.h.b16 %v270
    %v596 = vunpack.c.l.b16 %v271
    %v597 = vunpack.c.h.b16 %v271
    %v598 = vunpack.c.l.b16 %v272
    %v599 = vunpack.c.h.b16 %v272
    %v600 = vunpack.c.l.b16 %v273
    %v601 = vunpack.c.h.b16 %v273
    %v602 = vunpack.c.l.b16 %v274
    %v603 = vunpack.c.h.b16 %v274
    %v604 = vunpack.c.l.b16 %v275
    %v605 = vunpack.c.h.b16 %v275
    %v606 = vunpack.c.l.b16 %v276
    %v607 = vunpack.c.h.b16 %v276
    %v608 = vunpack.c.l.b16 %v277
    %v609 = vunpack.c.h.b16 %v277
    %v610 = vunpack.c.l.b16 %v278
    %v611 = vunpack.c.h.b16 %v278
    %v612 = vunpack.c.l.b16 %v279
    %v613 = vunpack.c.h.b16 %v279
    %v614 = vunpack.c.l.b16 %v280
    %v615 = vunpack.c.h.b16 %v280
    %v616 = vunpack.c.l.b16 %v281
    %v617 = vunpack.c.h.b16 %v281
    %v618 = vunpack.c.l.b16 %v282
    %v619 = vunpack.c.h.b16 %v282
    %v620 = vunpack.c.l.b16 %v283
    %v621 = vunpack.c.h.b16 %v283
    %v622 = vunpack.c.l.b16 %v284
    %v623 = vunpack.c.h.b16 %v284
    %v624 = vunpack.c.l.b16 %v285
    %v625 = vunpack.c.h.b16 %v285
    %v626 = vunpack.c.l.b16 %v286
    %v627 = vunpack.c.h.b16 %v286
    %v628 = vunpack.c.l.b16 %v287
    %v629 = vunpack.c.h.b16 %v287
    %v630 = vunpack.c.l.b16 %v288
    %v631 = vunpack.c.h.b16 %v288
    %v632 = vunpack.c.l.b16 %v289
    %v633 = vunpack.c.h.b16 %v289
    %v634 = vunpack.c.l.b16 %v290
    %v635 = vunpack.c.h.b16 %v290
    %v636 = vunpack.c.l.b16 %v291
    %v637 = vunpack.c.h.b16 %v291
    %v638 = vunpack.c.l.b16 %v292
    %v639 = vunpack.c.h.b16 %v292
    %v640 = vunpack.c.l.b16 %v293
    %v641 = vunpack.c.h.b16 %v293
    %v642 = vunpack.c.l.b16 %v294
    %v643 = vunpack.c.h.b16 %v294
    %v644 = vunpack.c.l.b16 %v295
    %v645 = vunpack.c.h.b16 %v295
    %v646 = vunpack.c.l.b16 %v296
    %v647 = vunpack.c.h.b16 %v296
    %v648 = vunpack.c.l.b16 %v297
    %v649 = vunpack.c.h.b16 %v297
    %v650 = vunpack.c.l.b16 %v298
    %v651 = vunpack.c.h.b16 %v298
    %v652 = vunpack.c.l.b16 %v299
    %v653 = vunpack.c.h.b16 %v299
    %v654 = vunpack.c.l.b16 %v300
    %v655 = vunpack.c.h.b16 %v300
    %v656 = vunpack.c.l.b16 %v301
    %v657 = vunpack.c.h.b16 %v301
    %v658 = vunpack.c.l.b16 %v302
    %v659 = vunpack.c.h.b16 %v302
    %v660 = vunpack.c.l.b16 %v303
    %v661 = vunpack.c.h.b16 %v303
    %v662 = vunpack.c.l.b16 %v304
    %v663 = vunpack.c.h.b16 %v304
    %v664 = vunpack.c.l.b16 %v305
    %v665 = vunpack.c.h.b16 %v305
    %v666 = vunpack.c.l.b16 %v306
    %v667 = vunpack.c.h.b16 %v306
    %v668 = vunpack.c.l.b16 %v307
    %v669 = vunpack.c.h.b16 %v307
    %v670 = vunpack.c.l.b16 %v308
    %v671 = vunpack.c.h.b16 %v308
    %v672 = vunpack.c.l.b16 %v309
    %v673 = vunpack.c.h.b16 %v309
    %v674 = vunpack.c.l.b16 %v310
    %v675 = vunpack.c.h.b16 %v310
    %v676 = vunpack.c.l.b16 %v311
    %v677 = vunpack.c.h.b16 %v311
    %v678 = vunpack.c.l.b16 %v312
    %v679 = vunpack.c.h.b16 %v312
    %v680 = vunpack.c.l.b16 %v313
    %v681 = vunpack.c.h.b16 %v313
    %v682 = vunpack.c.l.b16 %v314
    %v683 = vunpack.c.h.b16 %v314
    %v684 = vunpack.c.l.b16 %v315
    %v685 = vunpack.c.h.b16 %v315
    %v686 = vunpack.c.l.b16 %v316
    %v687 = vunpack.c.h.b16 %v316
    %v688 = vunpack.c.l.b16 %v317
    %v689 = vunpack.c.h.b16 %v317
    %v690 = vunpack.c.l.b16 %v318
    %v691 = vunpack.c.h.b16 %v318
    %v692 = vunpack.c.l.b16 %v319
    %v693 = vunpack.c.h.b16 %v319
    %v694 = vunpack.c.l.b16 %v320
    %v695 = vunpack.c.h.b16 %v320
    %v696 = vunpack.c.l.b16 %v321
    %v697 = vunpack.c.h.b16 %v321
    %v698 = vunpack.c.l.b16 %v322
    %v699 = vunpack.c.h.b16 %v322
    %v700 = vunpack.c.l.b16 %v323
    %v701 = vunpack.c.h.b16 %v323
    %v702 = vunpack.c.l.b16 %v324
    %v703 = vunpack.c.h.b16 %v324
    %v704 = vunpack.c.l.b16 %v325
    %v705 = vunpack.c.h.b16 %v325
    %v706 = vunpack.c.l.b16 %v326
    %v707 = vunpack.c.h.b16 %v326
    %v708 = vunpack.c.l.b16 %v327
    %v709 = vunpack.c.h.b16 %v327
    %v710 = vunpack.c.l.b16 %v328
    %v711 = vunpack.c.h.b16 %v328
    %v712 = vunpack.c.l.b16 %v329
    %v713 = vunpack.c.h.b16 %v329
    %v714 = vunpack.c.l.b16 %v330
    %v715 = vunpack.c.h.b16 %v330
    %v716 = vunpack.c.l.b16 %v331
    %v717 = vunpack.c.h.b16 %v331
    %v718 = vunpack.c.l.b16 %v332
    %v719 = vunpack.c.h.b16 %v332
    %v720 = vunpack.c.l.b16 %v333
    %v721 = vunpack.c.h.b16 %v333
    %v722 = vunpack.c.l.b16 %v334
    %v723 = vunpack.c.h.b16 %v334
    %v724 = vunpack.c.l.b16 %v335
    %v725 = vunpack.c.h.b16 %v335
    %v726 = vunpack.c.l.b16 %v336
    %v727 = vunpack.c.h.b16 %v336
    %v728 = vunpack.c.l.b16 %v337
    %v729 = vunpack.c.h.b16 %v337
    %v730 = vunpack.c.l.b16 %v338
    %v731 = vunpack.c.h.b16 %v338
    %v732 = vunpack.c.l.b16 %v339
    %v733 = vunpack.c.h.b16 %v339
    %v734 = vunpack.c.l.b16 %v340
    %v735 = vunpack.c.h.b16 %v340
    %v736 = vunpack.c.l.b16 %v341
    %v737 = vunpack.c.h.b16 %v341
    %v738 = vunpack.c.l.b16 %v342
    %v739 = vunpack.c.h.b16 %v342
    %v740 = vunpack.c.l.b16 %v343
    %v741 = vunpack.c.h.b16 %v343
    %v742 = vunpack.c.l.b16 %v344
    %v743 = vunpack.c.h.b16 %v344
    %v744 = vunpack.c.l.b16 %v345
    %v745 = vunpack.c.h.b16 %v345
    %v746 = vunpack.c.l.b16 %v346
    %v747 = vunpack.c.h.b16 %v346
    %v748 = vunpack.c.l.b16 %v347
    %v749 = vunpack.c.h.b16 %v347
    %v750 = vunpack.c.l.b16 %v348
    %v751 = vunpack.c.h.b16 %v348
    %v752 = vunpack.c.l.b16 %v349
    %v753 = vunpack.c.h.b16 %v349
    %v754 = vunpack.c.l.b16 %v350
    %v755 = vunpack.c.h.b16 %v350
    %v756 = vpack.c.b16 %v504, %v500
    %v757 = vpack.c.b16 %v505, %v501
    %v758 = vpack.c.b16 %v506, %v502
    %v759 = vpack.c.b16 %v507, %v503
    %v760 = vpack.c.b16 %v512, %v508
    %v761 = vpack.c.b16 %v513, %v509
    %v762 = vpack.c.b16 %v514, %v510
    %v763 = vpack.c.b16 %v515, %v511
    %v764 = vpack.c.b16 %v520, %v516
    %v765 = vpack.c.b16 %v521, %v517
    %v766 = vpack.c.b16 %v522, %v518
    %v767 = vpack.c.b16 %v523, %v519
    %v768 = vpack.c.b16 %v528, %v524
    %v769 = vpack.c.b16 %v529, %v525
    %v770 = vpack.c.b16 %v530, %v526
    %v771 = vpack.c.b16 %v531, %v527
    %v772 = vpack.c.b16 %v536, %v532
    %v773 = vpack.c.b16 %v537, %v533
    %v774 = vpack.c.b16 %v538, %v534
    %v775 = vpack.c.b16 %v539, %v535
    %v776 = vpack.c.b16 %v544, %v540
    %v777 = vpack.c.b16 %v545, %v541
    %v778 = vpack.c.b16 %v546, %v542
    %v779 = vpack.c.b16 %v547, %v543
    %v780 = vpack.c.b16 %v552, %v548
    %v781 = vpack.c.b16 %v553, %v549
    %v782 = vpack.c.b16 %v554, %v550
    %v783 = vpack.c.b16 %v555, %v551
    %v784 = vpack.c.b16 %v560, %v556
    %v785 = vpack.c.b16 %v561, %v557
    %v786 = vpack.c.b16 %v562, %v558
    %v787 = vpack.c.b16 %v563, %v559
    %v788 = vpack.c.b16 %v568, %v564
    %v789 = vpack.c.b16 %v569, %v565
    %v790 = vpack.c.b16 %v570, %v566
    %v791 = vpack.c.b16 %v571, %v567
    %v792 = vpack.c.b16 %v576, %v572
    %v793 = vpack.c.b16 %v577, %v573
    %v794 = vpack.c.b16 %v578, %v574
    %v795 = vpack.c.b16 %v579, %v575
    %v796 = vpack.c.b16 %v584, %v580
    %v797 = vpack.c.b16 %v585, %v581
    %v798 = vpack.c.b16 %v586, %v582
    %v799 = vpack.c.b16 %v587, %v583
    %v800 = vpack.c.b16 %v592, %v588
    %v801 = vpack.c.b16 %v593, %v589
    %v802 = vpack.c.b16 %v594, %v590
    %v803 = vpack.c.b16 %v595, %v591
    %v804 = vpack.c.b16 %v600, %v596
    %v805 = vpack.c.b16 %v601, %v597
    %v806 = vpack.c.b16 %v602, %v598
    %v807 = vpack.c.b16 %v603, %v599
    %v808 = vpack.c.b16 %v608, %v604
    %v809 = vpack.c.b16 %v609, %v605
    %v810 = vpack.c.b16 %v610, %v606
    %v811 = vpack.c.b16 %v611, %v607
    %v812 = vpack.c.b16 %v616, %v612
    %v813 = vpack.c.b16 %v617, %v613
    %v814 = vpack.c.b16 %v618, %v614
    %v815 = vpack.c.b16 %v619, %v615
    %v816 = vpack.c.b16 %v624, %v620
    %v817 = vpack.c.b16 %v625, %v621
    %v818 = vpack.c.b16 %v626, %v622
    %v819 = vpack.c.b16 %v627, %v623
    %v820 = vpack.c.b16 %v632, %v628
    %v821 = vpack.c.b16 %v633, %v629
    %v822 = vpack.c.b16 %v634, %v630
    %v823 = vpack.c.b16 %v635, %v631
    %v824 = vpack.c.b16 %v640, %v636
    %v825 = vpack.c.b16 %v641, %v637
    %v826 = vpack.c.b16 %v642, %v638
    %v827 = vpack.c.b16 %v643, %v639
    %v828 = vpack.c.b16 %v648, %v644
    %v829 = vpack.c.b16 %v649, %v645
    %v830 = vpack.c.b16 %v650, %v646
    %v831 = vpack.c.b16 %v651, %v647
    %v832 = vpack.c.b16 %v656, %v652
    %v833 = vpack.c.b16 %v657, %v653
    %v834 = vpack.c.b16 %v658, %v654
    %v835 = vpack.c.b16 %v659, %v655
    %v836 = vpack.c.b16 %v664, %v660
    %v837 = vpack.c.b16 %v665, %v661
    %v838 = vpack.c.b16 %v666, %v662
    %v839 = vpack.c.b16 %v667, %v663
    %v840 = vpack.c.b16 %v672, %v668
    %v841 = vpack.c.b16 %v673, %v669
    %v842 = vpack.c.b16 %v674, %v670
    %v843 = vpack.c.b16 %v675, %v671
    %v844 = vpack.c.b16 %v680, %v676
    %v845 = vpack.c.b16 %v681, %v677
    %v846 = vpack.c.b16 %v682, %v678
    %v847 = vpack.c.b16 %v683, %v679
    %v848 = vpack.c.b16 %v688, %v684
    %v849 = vpack.c.b16 %v689, %v685
    %v850 = vpack.c.b16 %v690, %v686
    %v851 = vpack.c.b16 %v691, %v687
    %v852 = vpack.c.b16 %v696, %v692
    %v853 = vpack.c.b16 %v697, %v693
    %v854 = vpack.c.b16 %v698, %v694
    %v855 = vpack.c.b16 %v699, %v695
    %v856 = vpack.c.b16 %v704, %v700
    %v857 = vpack.c.b16 %v705, %v701
    %v858 = vpack.c.b16 %v706, %v702
    %v859 = vpack.c.b16 %v707, %v703
    %v860 = vpack.c.b16 %v712, %v708
    %v861 = vpack.c.b16 %v713, %v709
    %v862 = vpack.c.b16 %v714, %v710
    %v863 = vpack.c.b16 %v715, %v711
    %v864 = vpack.c.b16 %v720, %v716
    %v865 = vpack.c.b16 %v721, %v717
    %v866 = vpack.c.b16 %v722, %v718
    %v867 = vpack.c.b16 %v723, %v719
    %v868 = vpack.c.b16 %v728, %v724
    %v869 = vpack.c.b16 %v729, %v725
    %v870 = vpack.c.b16 %v730, %v726
    %v871 = vpack.c.b16 %v731, %v727
    %v872 = vpack.c.b16 %v736, %v732
    %v873 = vpack.c.b16 %v737, %v733
    %v874 = vpack.c.b16 %v738, %v734
    %v875 = vpack.c.b16 %v739, %v735
    %v876 = vpack.c.b16 %v744, %v740
    %v877 = vpack.c.b16 %v745, %v741
    %v878 = vpack.c.b16 %v746, %v742
    %v879 = vpack.c.b16 %v747, %v743
    %v880 = vpack.c.b16 %v752, %v748
    %v881 = vpack.c.b16 %v753, %v749
    %v882 = vpack.c.b16 %v754, %v750
    %v883 = vpack.c.b16 %v755, %v751
    %1012 = vmatprep.subr.bf16.mxu0 %v785
    %1013 = vmatpush1.bf16.msra.mxu0 %v784
    %1014 = vmatprep.subr.bf16.mxu0 %v781
    %1015 = vmatpush1.bf16.msra.mxu0 %v780
    %1016 = vmatprep.subr.bf16.mxu0 %v777
    %1017 = vmatpush1.bf16.msra.mxu0 %v776
    %1018 = vmatprep.subr.bf16.mxu0 %v773
    %1019 = vmatpush1.bf16.msra.mxu0 %v772
    %1020 = vmatprep.subr.bf16.mxu0 %v769
    %1021 = vmatpush1.bf16.msra.mxu0 %v768
    %1022 = vmatprep.subr.bf16.mxu0 %v765
    %1023 = vmatpush1.bf16.msra.mxu0 %v764
    %1024 = vmatprep.subr.bf16.mxu0 %v761
    %1025 = vmatpush1.bf16.msra.mxu0 %v760
    %1026 = vmatprep.subr.bf16.mxu0 %v757
    %1027 = vmatpush1.bf16.msra.mxu0 %v756
    %1028 = vmatprep.subr.bf16.mxu0 %v817
    %1029 = vmatpush2.bf16.msra.mxu0 %v816
    %1030 = vmatprep.subr.bf16.mxu0 %v813
    %1031 = vmatpush2.bf16.msra.mxu0 %v812
    %1032 = vmatprep.subr.bf16.mxu0 %v809
    %1033 = vmatpush2.bf16.msra.mxu0 %v808
    %1034 = vmatprep.subr.bf16.mxu0 %v805
    %1035 = vmatpush2.bf16.msra.mxu0 %v804
    %1036 = vmatprep.subr.bf16.mxu0 %v801
    %1037 = vmatpush2.bf16.msra.mxu0 %v800
    %1038 = vmatprep.subr.bf16.mxu0 %v797
    %1039 = vmatpush2.bf16.msra.mxu0 %v796
    %1040 = vmatprep.subr.bf16.mxu0 %v793
    %1041 = vmatpush2.bf16.msra.mxu0 %v792
    %1042 = vmatprep.subr.bf16.mxu0 %v789
    %1043 = vmatpush2.bf16.msra.mxu0 %v788
    %1044 = vmatprep.mubr.bf16.mxu0 %v220
    %1045 = vmatmul.mubr.bf16.gmra.mxu0 %v219
    %v1046 = vpop.f32.mrf.mxu0
    %v1047 = vadd.f32 %v355, %v1046
    %v1048 = vpop.f32.mrf.mxu0
    %v1049 = vadd.f32 %v359, %v1048
    %v1050 = vpop.f32.mrf.mxu0
    %v1051 = vpop.f32.mrf.mxu0
    %1052 = vdwg.mxu0
    %1053 = vmatprep.subr.bf16.mxu0 %v849
    %1054 = vmatpush1.bf16.msra.mxu0 %v848
    %1055 = vmatprep.subr.bf16.mxu0 %v845
    %1056 = vmatpush1.bf16.msra.mxu0 %v844
    %1057 = vmatprep.subr.bf16.mxu0 %v841
    %1058 = vmatpush1.bf16.msra.mxu0 %v840
    %1059 = vmatprep.subr.bf16.mxu0 %v837
    %1060 = vmatpush1.bf16.msra.mxu0 %v836
    %1061 = vmatprep.subr.bf16.mxu0 %v833
    %1062 = vmatpush1.bf16.msra.mxu0 %v832
    %1063 = vmatprep.subr.bf16.mxu0 %v829
    %1064 = vmatpush1.bf16.msra.mxu0 %v828
    %1065 = vmatprep.subr.bf16.mxu0 %v825
    %1066 = vmatpush1.bf16.msra.mxu0 %v824
    %1067 = vmatprep.subr.bf16.mxu0 %v821
    %1068 = vmatpush1.bf16.msra.mxu0 %v820
    %1069 = vmatprep.subr.bf16.mxu0 %v881
    %1070 = vmatpush2.bf16.msra.mxu0 %v880
    %1071 = vmatprep.subr.bf16.mxu0 %v877
    %1072 = vmatpush2.bf16.msra.mxu0 %v876
    %1073 = vmatprep.subr.bf16.mxu0 %v873
    %1074 = vmatpush2.bf16.msra.mxu0 %v872
    %1075 = vmatprep.subr.bf16.mxu0 %v869
    %1076 = vmatpush2.bf16.msra.mxu0 %v868
    %1077 = vmatprep.subr.bf16.mxu0 %v865
    %1078 = vmatpush2.bf16.msra.mxu0 %v864
    %1079 = vmatprep.subr.bf16.mxu0 %v861
    %1080 = vmatpush2.bf16.msra.mxu0 %v860
    %1081 = vmatprep.subr.bf16.mxu0 %v857
    %1082 = vmatpush2.bf16.msra.mxu0 %v856
    %1083 = vmatprep.subr.bf16.mxu0 %v853
    %1084 = vmatpush2.bf16.msra.mxu0 %v852
    %1085 = vmatprep.mubr.bf16.mxu0 %v222
    %1086 = vmatmul.mubr.bf16.gmra.mxu0 %v221
    %v1087 = vpop.f32.mrf.mxu0
    %v1088 = vadd.f32 %v1047, %v1087
    %v1089 = vpop.f32.mrf.mxu0
    %v1090 = vadd.f32 %v1049, %v1089
    %v1091 = vpop.f32.mrf.mxu0
    %v1092 = vpop.f32.mrf.mxu0
    %1093 = vdwg.mxu0
    %1094 = vmatprep.subr.bf16.mxu0 %v787
    %1095 = vmatpush1.bf16.msra.mxu0 %v786
    %1096 = vmatprep.subr.bf16.mxu0 %v783
    %1097 = vmatpush1.bf16.msra.mxu0 %v782
    %1098 = vmatprep.subr.bf16.mxu0 %v779
    %1099 = vmatpush1.bf16.msra.mxu0 %v778
    %1100 = vmatprep.subr.bf16.mxu0 %v775
    %1101 = vmatpush1.bf16.msra.mxu0 %v774
    %1102 = vmatprep.subr.bf16.mxu0 %v771
    %1103 = vmatpush1.bf16.msra.mxu0 %v770
    %1104 = vmatprep.subr.bf16.mxu0 %v767
    %1105 = vmatpush1.bf16.msra.mxu0 %v766
    %1106 = vmatprep.subr.bf16.mxu0 %v763
    %1107 = vmatpush1.bf16.msra.mxu0 %v762
    %1108 = vmatprep.subr.bf16.mxu0 %v759
    %1109 = vmatpush1.bf16.msra.mxu0 %v758
    %1110 = vmatprep.subr.bf16.mxu0 %v819
    %1111 = vmatpush2.bf16.msra.mxu0 %v818
    %1112 = vmatprep.subr.bf16.mxu0 %v815
    %1113 = vmatpush2.bf16.msra.mxu0 %v814
    %1114 = vmatprep.subr.bf16.mxu0 %v811
    %1115 = vmatpush2.bf16.msra.mxu0 %v810
    %1116 = vmatprep.subr.bf16.mxu0 %v807
    %1117 = vmatpush2.bf16.msra.mxu0 %v806
    %1118 = vmatprep.subr.bf16.mxu0 %v803
    %1119 = vmatpush2.bf16.msra.mxu0 %v802
    %1120 = vmatprep.subr.bf16.mxu0 %v799
    %1121 = vmatpush2.bf16.msra.mxu0 %v798
    %1122 = vmatprep.subr.bf16.mxu0 %v795
    %1123 = vmatpush2.bf16.msra.mxu0 %v794
    %1124 = vmatprep.subr.bf16.mxu0 %v791
    %1125 = vmatpush2.bf16.msra.mxu0 %v790
    %1126 = vmatprep.mubr.bf16.mxu0 %v220
    %1127 = vmatmul.mubr.bf16.gmra.mxu0 %v219
    %v1128 = vpop.f32.mrf.mxu0
    %v1129 = vadd.f32 %v363, %v1128
    %v1130 = vpop.f32.mrf.mxu0
    %v1131 = vadd.f32 %v367, %v1130
    %v1132 = vpop.f32.mrf.mxu0
    %v1133 = vpop.f32.mrf.mxu0
    %1134 = vdwg.mxu0
    %1135 = vmatprep.subr.bf16.mxu0 %v851
    %1136 = vmatpush1.bf16.msra.mxu0 %v850
    %1137 = vmatprep.subr.bf16.mxu0 %v847
    %1138 = vmatpush1.bf16.msra.mxu0 %v846
    %1139 = vmatprep.subr.bf16.mxu0 %v843
    %1140 = vmatpush1.bf16.msra.mxu0 %v842
    %1141 = vmatprep.subr.bf16.mxu0 %v839
    %1142 = vmatpush1.bf16.msra.mxu0 %v838
    %1143 = vmatprep.subr.bf16.mxu0 %v835
    %1144 = vmatpush1.bf16.msra.mxu0 %v834
    %1145 = vmatprep.subr.bf16.mxu0 %v831
    %1146 = vmatpush1.bf16.msra.mxu0 %v830
    %1147 = vmatprep.subr.bf16.mxu0 %v827
    %1148 = vmatpush1.bf16.msra.mxu0 %v826
    %1149 = vmatprep.subr.bf16.mxu0 %v823
    %1150 = vmatpush1.bf16.msra.mxu0 %v822
    %1151 = vmatprep.subr.bf16.mxu0 %v883
    %1152 = vmatpush2.bf16.msra.mxu0 %v882
    %1153 = vmatprep.subr.bf16.mxu0 %v879
    %1154 = vmatpush2.bf16.msra.mxu0 %v878
    %1155 = vmatprep.subr.bf16.mxu0 %v875
    %1156 = vmatpush2.bf16.msra.mxu0 %v874
    %1157 = vmatprep.subr.bf16.mxu0 %v871
    %1158 = vmatpush2.bf16.msra.mxu0 %v870
    %1159 = vmatprep.subr.bf16.mxu0 %v867
    %1160 = vmatpush2.bf16.msra.mxu0 %v866
    %1161 = vmatprep.subr.bf16.mxu0 %v863
    %1162 = vmatpush2.bf16.msra.mxu0 %v862
    %1163 = vmatprep.subr.bf16.mxu0 %v859
    %1164 = vmatpush2.bf16.msra.mxu0 %v858
    %1165 = vmatprep.subr.bf16.mxu0 %v855
    %1166 = vmatpush2.bf16.msra.mxu0 %v854
    %1167 = vmatprep.mubr.bf16.mxu0 %v222
    %1168 = vmatmul.mubr.bf16.gmra.mxu0 %v221
    %v1169 = vpop.f32.mrf.mxu0
    %v1170 = vadd.f32 %v1129, %v1169
    %v1171 = vpop.f32.mrf.mxu0
    %v1172 = vadd.f32 %v1131, %v1171
    %v1173 = vpop.f32.mrf.mxu0
    %v1174 = vpop.f32.mrf.mxu0
    %1175 = vdwg.mxu0
    %v1176 = vmax.f32 %v1088, 0.0
    %v1177 = vmax.f32 %v1090, 0.0
    %v1178 = vmax.f32 %v1170, 0.0
    %v1179 = vmax.f32 %v1172, 0.0
    %v1180 = vpack.c.bf16 %v1176, %v1176
    %v1181 = vpack.c.bf16 %v1177, %v1177
    %v1182 = vpack.c.bf16 %v1178, %v1178
    %v1183 = vpack.c.bf16 %v1179, %v1179
    %v1184 = vld [vmem:[#allocation2 + $0x400] sm:$0xff]
    %v1185 = vld [vmem:[#allocation2 + $0x408] sm:$0xff]
    %v1186 = vld [vmem:[#allocation2 + $0x410] sm:$0xff]
    %v1187 = vld [vmem:[#allocation2 + $0x418] sm:$0xff]
    %v1188 = vld [vmem:[#allocation2 + $0x420] sm:$0xff]
    %v1189 = vld [vmem:[#allocation2 + $0x428] sm:$0xff]
    %v1190 = vld [vmem:[#allocation2 + $0x430] sm:$0xff]
    %v1191 = vld [vmem:[#allocation2 + $0x438] sm:$0xff]
    %v1192 = vld [vmem:[#allocation2 + $0x440] sm:$0xff]
    %v1193 = vld [vmem:[#allocation2 + $0x448] sm:$0xff]
    %v1194 = vld [vmem:[#allocation2 + $0x450] sm:$0xff]
    %v1195 = vld [vmem:[#allocation2 + $0x458] sm:$0xff]
    %v1196 = vld [vmem:[#allocation2 + $0x460] sm:$0xff]
    %v1197 = vld [vmem:[#allocation2 + $0x468] sm:$0xff]
    %v1198 = vld [vmem:[#allocation2 + $0x470] sm:$0xff]
    %v1199 = vld [vmem:[#allocation2 + $0x478] sm:$0xff]
    %v1200 = vld [vmem:[#allocation2 + $0x480] sm:$0xff]
    %v1201 = vld [vmem:[#allocation2 + $0x488] sm:$0xff]
    %v1202 = vld [vmem:[#allocation2 + $0x490] sm:$0xff]
    %v1203 = vld [vmem:[#allocation2 + $0x498] sm:$0xff]
    %v1204 = vld [vmem:[#allocation2 + $0x4a0] sm:$0xff]
    %v1205 = vld [vmem:[#allocation2 + $0x4a8] sm:$0xff]
    %v1206 = vld [vmem:[#allocation2 + $0x4b0] sm:$0xff]
    %v1207 = vld [vmem:[#allocation2 + $0x4b8] sm:$0xff]
    %v1208 = vld [vmem:[#allocation2 + $0x4c0] sm:$0xff]
    %v1209 = vld [vmem:[#allocation2 + $0x4c8] sm:$0xff]
    %v1210 = vld [vmem:[#allocation2 + $0x4d0] sm:$0xff]
    %v1211 = vld [vmem:[#allocation2 + $0x4d8] sm:$0xff]
    %v1212 = vld [vmem:[#allocation2 + $0x4e0] sm:$0xff]
    %v1213 = vld [vmem:[#allocation2 + $0x4e8] sm:$0xff]
    %v1214 = vld [vmem:[#allocation2 + $0x4f0] sm:$0xff]
    %v1215 = vld [vmem:[#allocation2 + $0x4f8] sm:$0xff]
    %v1216 = vld [vmem:[#allocation2 + $0x500] sm:$0xff]
    %v1217 = vld [vmem:[#allocation2 + $0x508] sm:$0xff]
    %v1218 = vld [vmem:[#allocation2 + $0x510] sm:$0xff]
    %v1219 = vld [vmem:[#allocation2 + $0x518] sm:$0xff]
    %v1220 = vld [vmem:[#allocation2 + $0x520] sm:$0xff]
    %v1221 = vld [vmem:[#allocation2 + $0x528] sm:$0xff]
    %v1222 = vld [vmem:[#allocation2 + $0x530] sm:$0xff]
    %v1223 = vld [vmem:[#allocation2 + $0x538] sm:$0xff]
    %v1224 = vld [vmem:[#allocation2 + $0x540] sm:$0xff]
    %v1225 = vld [vmem:[#allocation2 + $0x548] sm:$0xff]
    %v1226 = vld [vmem:[#allocation2 + $0x550] sm:$0xff]
    %v1227 = vld [vmem:[#allocation2 + $0x558] sm:$0xff]
    %v1228 = vld [vmem:[#allocation2 + $0x560] sm:$0xff]
    %v1229 = vld [vmem:[#allocation2 + $0x568] sm:$0xff]
    %v1230 = vld [vmem:[#allocation2 + $0x570] sm:$0xff]
    %v1231 = vld [vmem:[#allocation2 + $0x578] sm:$0xff]
    %v1232 = vld [vmem:[#allocation2 + $0x580] sm:$0xff]
    %v1233 = vld [vmem:[#allocation2 + $0x588] sm:$0xff]
    %v1234 = vld [vmem:[#allocation2 + $0x590] sm:$0xff]
    %v1235 = vld [vmem:[#allocation2 + $0x598] sm:$0xff]
    %v1236 = vld [vmem:[#allocation2 + $0x5a0] sm:$0xff]
    %v1237 = vld [vmem:[#allocation2 + $0x5a8] sm:$0xff]
    %v1238 = vld [vmem:[#allocation2 + $0x5b0] sm:$0xff]
    %v1239 = vld [vmem:[#allocation2 + $0x5b8] sm:$0xff]
    %v1240 = vld [vmem:[#allocation2 + $0x5c0] sm:$0xff]
    %v1241 = vld [vmem:[#allocation2 + $0x5c8] sm:$0xff]
    %v1242 = vld [vmem:[#allocation2 + $0x5d0] sm:$0xff]
    %v1243 = vld [vmem:[#allocation2 + $0x5d8] sm:$0xff]
    %v1244 = vld [vmem:[#allocation2 + $0x5e0] sm:$0xff]
    %v1245 = vld [vmem:[#allocation2 + $0x5e8] sm:$0xff]
    %v1246 = vld [vmem:[#allocation2 + $0x5f0] sm:$0xff]
    %v1247 = vld [vmem:[#allocation2 + $0x5f8] sm:$0xff]
    %v1248 = vld [vmem:[#allocation2 + $0x600] sm:$0xff]
    %v1249 = vld [vmem:[#allocation2 + $0x608] sm:$0xff]
    %v1250 = vld [vmem:[#allocation2 + $0x610] sm:$0xff]
    %v1251 = vld [vmem:[#allocation2 + $0x618] sm:$0xff]
    %v1252 = vld [vmem:[#allocation2 + $0x620] sm:$0xff]
    %v1253 = vld [vmem:[#allocation2 + $0x628] sm:$0xff]
    %v1254 = vld [vmem:[#allocation2 + $0x630] sm:$0xff]
    %v1255 = vld [vmem:[#allocation2 + $0x638] sm:$0xff]
    %v1256 = vld [vmem:[#allocation2 + $0x640] sm:$0xff]
    %v1257 = vld [vmem:[#allocation2 + $0x648] sm:$0xff]
    %v1258 = vld [vmem:[#allocation2 + $0x650] sm:$0xff]
    %v1259 = vld [vmem:[#allocation2 + $0x658] sm:$0xff]
    %v1260 = vld [vmem:[#allocation2 + $0x660] sm:$0xff]
    %v1261 = vld [vmem:[#allocation2 + $0x668] sm:$0xff]
    %v1262 = vld [vmem:[#allocation2 + $0x670] sm:$0xff]
    %v1263 = vld [vmem:[#allocation2 + $0x678] sm:$0xff]
    %v1264 = vld [vmem:[#allocation2 + $0x680] sm:$0xff]
    %v1265 = vld [vmem:[#allocation2 + $0x688] sm:$0xff]
    %v1266 = vld [vmem:[#allocation2 + $0x690] sm:$0xff]
    %v1267 = vld [vmem:[#allocation2 + $0x698] sm:$0xff]
    %v1268 = vld [vmem:[#allocation2 + $0x6a0] sm:$0xff]
    %v1269 = vld [vmem:[#allocation2 + $0x6a8] sm:$0xff]
    %v1270 = vld [vmem:[#allocation2 + $0x6b0] sm:$0xff]
    %v1271 = vld [vmem:[#allocation2 + $0x6b8] sm:$0xff]
    %v1272 = vld [vmem:[#allocation2 + $0x6c0] sm:$0xff]
    %v1273 = vld [vmem:[#allocation2 + $0x6c8] sm:$0xff]
    %v1274 = vld [vmem:[#allocation2 + $0x6d0] sm:$0xff]
    %v1275 = vld [vmem:[#allocation2 + $0x6d8] sm:$0xff]
    %v1276 = vld [vmem:[#allocation2 + $0x6e0] sm:$0xff]
    %v1277 = vld [vmem:[#allocation2 + $0x6e8] sm:$0xff]
    %v1278 = vld [vmem:[#allocation2 + $0x6f0] sm:$0xff]
    %v1279 = vld [vmem:[#allocation2 + $0x6f8] sm:$0xff]
    %v1280 = vld [vmem:[#allocation2 + $0x700] sm:$0xff]
    %v1281 = vld [vmem:[#allocation2 + $0x708] sm:$0xff]
    %v1282 = vld [vmem:[#allocation2 + $0x710] sm:$0xff]
    %v1283 = vld [vmem:[#allocation2 + $0x718] sm:$0xff]
    %v1284 = vld [vmem:[#allocation2 + $0x720] sm:$0xff]
    %v1285 = vld [vmem:[#allocation2 + $0x728] sm:$0xff]
    %v1286 = vld [vmem:[#allocation2 + $0x730] sm:$0xff]
    %v1287 = vld [vmem:[#allocation2 + $0x738] sm:$0xff]
    %v1288 = vld [vmem:[#allocation2 + $0x740] sm:$0xff]
    %v1289 = vld [vmem:[#allocation2 + $0x748] sm:$0xff]
    %v1290 = vld [vmem:[#allocation2 + $0x750] sm:$0xff]
    %v1291 = vld [vmem:[#allocation2 + $0x758] sm:$0xff]
    %v1292 = vld [vmem:[#allocation2 + $0x760] sm:$0xff]
    %v1293 = vld [vmem:[#allocation2 + $0x768] sm:$0xff]
    %v1294 = vld [vmem:[#allocation2 + $0x770] sm:$0xff]
    %v1295 = vld [vmem:[#allocation2 + $0x778] sm:$0xff]
    %v1296 = vld [vmem:[#allocation2 + $0x780] sm:$0xff]
    %v1297 = vld [vmem:[#allocation2 + $0x788] sm:$0xff]
    %v1298 = vld [vmem:[#allocation2 + $0x790] sm:$0xff]
    %v1299 = vld [vmem:[#allocation2 + $0x798] sm:$0xff]
    %v1300 = vld [vmem:[#allocation2 + $0x7a0] sm:$0xff]
    %v1301 = vld [vmem:[#allocation2 + $0x7a8] sm:$0xff]
    %v1302 = vld [vmem:[#allocation2 + $0x7b0] sm:$0xff]
    %v1303 = vld [vmem:[#allocation2 + $0x7b8] sm:$0xff]
    %v1304 = vld [vmem:[#allocation2 + $0x7c0] sm:$0xff]
    %v1305 = vld [vmem:[#allocation2 + $0x7c8] sm:$0xff]
    %v1306 = vld [vmem:[#allocation2 + $0x7d0] sm:$0xff]
    %v1307 = vld [vmem:[#allocation2 + $0x7d8] sm:$0xff]
    %v1308 = vld [vmem:[#allocation2 + $0x7e0] sm:$0xff]
    %v1309 = vld [vmem:[#allocation2 + $0x7e8] sm:$0xff]
    %v1310 = vld [vmem:[#allocation2 + $0x7f0] sm:$0xff]
    %v1311 = vld [vmem:[#allocation2 + $0x7f8] sm:$0xff]
    %v1313 = vlaneseq
    %v1314 = vshrl.u32 %v1313, 7
    %v1315 = vsub.s32 0, %v1314
    %v1316 = vrot.slane %v46, %v1315
    %v1317 = vlaneseq
    %v1318 = vshrl.u32 %v1317, 7
    %v1319 = vsub.s32 1, %v1318
    %v1320 = vrot.slane %v46, %v1319
    %v1321 = vlaneseq
    %v1322 = vshrl.u32 %v1321, 7
    %v1323 = vsub.s32 2, %v1322
    %v1324 = vrot.slane %v46, %v1323
    %v1325 = vlaneseq
    %v1326 = vshrl.u32 %v1325, 7
    %v1327 = vsub.s32 3, %v1326
    %v1328 = vrot.slane %v46, %v1327
    %v1461 = vunpack.c.l.b16 %v1184
    %v1462 = vunpack.c.h.b16 %v1184
    %v1463 = vunpack.c.l.b16 %v1185
    %v1464 = vunpack.c.h.b16 %v1185
    %v1465 = vunpack.c.l.b16 %v1186
    %v1466 = vunpack.c.h.b16 %v1186
    %v1467 = vunpack.c.l.b16 %v1187
    %v1468 = vunpack.c.h.b16 %v1187
    %v1469 = vunpack.c.l.b16 %v1188
    %v1470 = vunpack.c.h.b16 %v1188
    %v1471 = vunpack.c.l.b16 %v1189
    %v1472 = vunpack.c.h.b16 %v1189
    %v1473 = vunpack.c.l.b16 %v1190
    %v1474 = vunpack.c.h.b16 %v1190
    %v1475 = vunpack.c.l.b16 %v1191
    %v1476 = vunpack.c.h.b16 %v1191
    %v1477 = vunpack.c.l.b16 %v1192
    %v1478 = vunpack.c.h.b16 %v1192
    %v1479 = vunpack.c.l.b16 %v1193
    %v1480 = vunpack.c.h.b16 %v1193
    %v1481 = vunpack.c.l.b16 %v1194
    %v1482 = vunpack.c.h.b16 %v1194
    %v1483 = vunpack.c.l.b16 %v1195
    %v1484 = vunpack.c.h.b16 %v1195
    %v1485 = vunpack.c.l.b16 %v1196
    %v1486 = vunpack.c.h.b16 %v1196
    %v1487 = vunpack.c.l.b16 %v1197
    %v1488 = vunpack.c.h.b16 %v1197
    %v1489 = vunpack.c.l.b16 %v1198
    %v1490 = vunpack.c.h.b16 %v1198
    %v1491 = vunpack.c.l.b16 %v1199
    %v1492 = vunpack.c.h.b16 %v1199
    %v1493 = vunpack.c.l.b16 %v1200
    %v1494 = vunpack.c.h.b16 %v1200
    %v1495 = vunpack.c.l.b16 %v1201
    %v1496 = vunpack.c.h.b16 %v1201
    %v1497 = vunpack.c.l.b16 %v1202
    %v1498 = vunpack.c.h.b16 %v1202
    %v1499 = vunpack.c.l.b16 %v1203
    %v1500 = vunpack.c.h.b16 %v1203
    %v1501 = vunpack.c.l.b16 %v1204
    %v1502 = vunpack.c.h.b16 %v1204
    %v1503 = vunpack.c.l.b16 %v1205
    %v1504 = vunpack.c.h.b16 %v1205
    %v1505 = vunpack.c.l.b16 %v1206
    %v1506 = vunpack.c.h.b16 %v1206
    %v1507 = vunpack.c.l.b16 %v1207
    %v1508 = vunpack.c.h.b16 %v1207
    %v1509 = vunpack.c.l.b16 %v1208
    %v1510 = vunpack.c.h.b16 %v1208
    %v1511 = vunpack.c.l.b16 %v1209
    %v1512 = vunpack.c.h.b16 %v1209
    %v1513 = vunpack.c.l.b16 %v1210
    %v1514 = vunpack.c.h.b16 %v1210
    %v1515 = vunpack.c.l.b16 %v1211
    %v1516 = vunpack.c.h.b16 %v1211
    %v1517 = vunpack.c.l.b16 %v1212
    %v1518 = vunpack.c.h.b16 %v1212
    %v1519 = vunpack.c.l.b16 %v1213
    %v1520 = vunpack.c.h.b16 %v1213
    %v1521 = vunpack.c.l.b16 %v1214
    %v1522 = vunpack.c.h.b16 %v1214
    %v1523 = vunpack.c.l.b16 %v1215
    %v1524 = vunpack.c.h.b16 %v1215
    %v1525 = vunpack.c.l.b16 %v1216
    %v1526 = vunpack.c.h.b16 %v1216
    %v1527 = vunpack.c.l.b16 %v1217
    %v1528 = vunpack.c.h.b16 %v1217
    %v1529 = vunpack.c.l.b16 %v1218
    %v1530 = vunpack.c.h.b16 %v1218
    %v1531 = vunpack.c.l.b16 %v1219
    %v1532 = vunpack.c.h.b16 %v1219
    %v1533 = vunpack.c.l.b16 %v1220
    %v1534 = vunpack.c.h.b16 %v1220
    %v1535 = vunpack.c.l.b16 %v1221
    %v1536 = vunpack.c.h.b16 %v1221
    %v1537 = vunpack.c.l.b16 %v1222
    %v1538 = vunpack.c.h.b16 %v1222
    %v1539 = vunpack.c.l.b16 %v1223
    %v1540 = vunpack.c.h.b16 %v1223
    %v1541 = vunpack.c.l.b16 %v1224
    %v1542 = vunpack.c.h.b16 %v1224
    %v1543 = vunpack.c.l.b16 %v1225
    %v1544 = vunpack.c.h.b16 %v1225
    %v1545 = vunpack.c.l.b16 %v1226
    %v1546 = vunpack.c.h.b16 %v1226
    %v1547 = vunpack.c.l.b16 %v1227
    %v1548 = vunpack.c.h.b16 %v1227
    %v1549 = vunpack.c.l.b16 %v1228
    %v1550 = vunpack.c.h.b16 %v1228
    %v1551 = vunpack.c.l.b16 %v1229
    %v1552 = vunpack.c.h.b16 %v1229
    %v1553 = vunpack.c.l.b16 %v1230
    %v1554 = vunpack.c.h.b16 %v1230
    %v1555 = vunpack.c.l.b16 %v1231
    %v1556 = vunpack.c.h.b16 %v1231
    %v1557 = vunpack.c.l.b16 %v1232
    %v1558 = vunpack.c.h.b16 %v1232
    %v1559 = vunpack.c.l.b16 %v1233
    %v1560 = vunpack.c.h.b16 %v1233
    %v1561 = vunpack.c.l.b16 %v1234
    %v1562 = vunpack.c.h.b16 %v1234
    %v1563 = vunpack.c.l.b16 %v1235
    %v1564 = vunpack.c.h.b16 %v1235
    %v1565 = vunpack.c.l.b16 %v1236
    %v1566 = vunpack.c.h.b16 %v1236
    %v1567 = vunpack.c.l.b16 %v1237
    %v1568 = vunpack.c.h.b16 %v1237
    %v1569 = vunpack.c.l.b16 %v1238
    %v1570 = vunpack.c.h.b16 %v1238
    %v1571 = vunpack.c.l.b16 %v1239
    %v1572 = vunpack.c.h.b16 %v1239
    %v1573 = vunpack.c.l.b16 %v1240
    %v1574 = vunpack.c.h.b16 %v1240
    %v1575 = vunpack.c.l.b16 %v1241
    %v1576 = vunpack.c.h.b16 %v1241
    %v1577 = vunpack.c.l.b16 %v1242
    %v1578 = vunpack.c.h.b16 %v1242
    %v1579 = vunpack.c.l.b16 %v1243
    %v1580 = vunpack.c.h.b16 %v1243
    %v1581 = vunpack.c.l.b16 %v1244
    %v1582 = vunpack.c.h.b16 %v1244
    %v1583 = vunpack.c.l.b16 %v1245
    %v1584 = vunpack.c.h.b16 %v1245
    %v1585 = vunpack.c.l.b16 %v1246
    %v1586 = vunpack.c.h.b16 %v1246
    %v1587 = vunpack.c.l.b16 %v1247
    %v1588 = vunpack.c.h.b16 %v1247
    %v1589 = vunpack.c.l.b16 %v1248
    %v1590 = vunpack.c.h.b16 %v1248
    %v1591 = vunpack.c.l.b16 %v1249
    %v1592 = vunpack.c.h.b16 %v1249
    %v1593 = vunpack.c.l.b16 %v1250
    %v1594 = vunpack.c.h.b16 %v1250
    %v1595 = vunpack.c.l.b16 %v1251
    %v1596 = vunpack.c.h.b16 %v1251
    %v1597 = vunpack.c.l.b16 %v1252
    %v1598 = vunpack.c.h.b16 %v1252
    %v1599 = vunpack.c.l.b16 %v1253
    %v1600 = vunpack.c.h.b16 %v1253
    %v1601 = vunpack.c.l.b16 %v1254
    %v1602 = vunpack.c.h.b16 %v1254
    %v1603 = vunpack.c.l.b16 %v1255
    %v1604 = vunpack.c.h.b16 %v1255
    %v1605 = vunpack.c.l.b16 %v1256
    %v1606 = vunpack.c.h.b16 %v1256
    %v1607 = vunpack.c.l.b16 %v1257
    %v1608 = vunpack.c.h.b16 %v1257
    %v1609 = vunpack.c.l.b16 %v1258
    %v1610 = vunpack.c.h.b16 %v1258
    %v1611 = vunpack.c.l.b16 %v1259
    %v1612 = vunpack.c.h.b16 %v1259
    %v1613 = vunpack.c.l.b16 %v1260
    %v1614 = vunpack.c.h.b16 %v1260
    %v1615 = vunpack.c.l.b16 %v1261
    %v1616 = vunpack.c.h.b16 %v1261
    %v1617 = vunpack.c.l.b16 %v1262
    %v1618 = vunpack.c.h.b16 %v1262
    %v1619 = vunpack.c.l.b16 %v1263
    %v1620 = vunpack.c.h.b16 %v1263
    %v1621 = vunpack.c.l.b16 %v1264
    %v1622 = vunpack.c.h.b16 %v1264
    %v1623 = vunpack.c.l.b16 %v1265
    %v1624 = vunpack.c.h.b16 %v1265
    %v1625 = vunpack.c.l.b16 %v1266
    %v1626 = vunpack.c.h.b16 %v1266
    %v1627 = vunpack.c.l.b16 %v1267
    %v1628 = vunpack.c.h.b16 %v1267
    %v1629 = vunpack.c.l.b16 %v1268
    %v1630 = vunpack.c.h.b16 %v1268
    %v1631 = vunpack.c.l.b16 %v1269
    %v1632 = vunpack.c.h.b16 %v1269
    %v1633 = vunpack.c.l.b16 %v1270
    %v1634 = vunpack.c.h.b16 %v1270
    %v1635 = vunpack.c.l.b16 %v1271
    %v1636 = vunpack.c.h.b16 %v1271
    %v1637 = vunpack.c.l.b16 %v1272
    %v1638 = vunpack.c.h.b16 %v1272
    %v1639 = vunpack.c.l.b16 %v1273
    %v1640 = vunpack.c.h.b16 %v1273
    %v1641 = vunpack.c.l.b16 %v1274
    %v1642 = vunpack.c.h.b16 %v1274
    %v1643 = vunpack.c.l.b16 %v1275
    %v1644 = vunpack.c.h.b16 %v1275
    %v1645 = vunpack.c.l.b16 %v1276
    %v1646 = vunpack.c.h.b16 %v1276
    %v1647 = vunpack.c.l.b16 %v1277
    %v1648 = vunpack.c.h.b16 %v1277
    %v1649 = vunpack.c.l.b16 %v1278
    %v1650 = vunpack.c.h.b16 %v1278
    %v1651 = vunpack.c.l.b16 %v1279
    %v1652 = vunpack.c.h.b16 %v1279
    %v1653 = vunpack.c.l.b16 %v1280
    %v1654 = vunpack.c.h.b16 %v1280
    %v1655 = vunpack.c.l.b16 %v1281
    %v1656 = vunpack.c.h.b16 %v1281
    %v1657 = vunpack.c.l.b16 %v1282
    %v1658 = vunpack.c.h.b16 %v1282
    %v1659 = vunpack.c.l.b16 %v1283
    %v1660 = vunpack.c.h.b16 %v1283
    %v1661 = vunpack.c.l.b16 %v1284
    %v1662 = vunpack.c.h.b16 %v1284
    %v1663 = vunpack.c.l.b16 %v1285
    %v1664 = vunpack.c.h.b16 %v1285
    %v1665 = vunpack.c.l.b16 %v1286
    %v1666 = vunpack.c.h.b16 %v1286
    %v1667 = vunpack.c.l.b16 %v1287
    %v1668 = vunpack.c.h.b16 %v1287
    %v1669 = vunpack.c.l.b16 %v1288
    %v1670 = vunpack.c.h.b16 %v1288
    %v1671 = vunpack.c.l.b16 %v1289
    %v1672 = vunpack.c.h.b16 %v1289
    %v1673 = vunpack.c.l.b16 %v1290
    %v1674 = vunpack.c.h.b16 %v1290
    %v1675 = vunpack.c.l.b16 %v1291
    %v1676 = vunpack.c.h.b16 %v1291
    %v1677 = vunpack.c.l.b16 %v1292
    %v1678 = vunpack.c.h.b16 %v1292
    %v1679 = vunpack.c.l.b16 %v1293
    %v1680 = vunpack.c.h.b16 %v1293
    %v1681 = vunpack.c.l.b16 %v1294
    %v1682 = vunpack.c.h.b16 %v1294
    %v1683 = vunpack.c.l.b16 %v1295
    %v1684 = vunpack.c.h.b16 %v1295
    %v1685 = vunpack.c.l.b16 %v1296
    %v1686 = vunpack.c.h.b16 %v1296
    %v1687 = vunpack.c.l.b16 %v1297
    %v1688 = vunpack.c.h.b16 %v1297
    %v1689 = vunpack.c.l.b16 %v1298
    %v1690 = vunpack.c.h.b16 %v1298
    %v1691 = vunpack.c.l.b16 %v1299
    %v1692 = vunpack.c.h.b16 %v1299
    %v1693 = vunpack.c.l.b16 %v1300
    %v1694 = vunpack.c.h.b16 %v1300
    %v1695 = vunpack.c.l.b16 %v1301
    %v1696 = vunpack.c.h.b16 %v1301
    %v1697 = vunpack.c.l.b16 %v1302
    %v1698 = vunpack.c.h.b16 %v1302
    %v1699 = vunpack.c.l.b16 %v1303
    %v1700 = vunpack.c.h.b16 %v1303
    %v1701 = vunpack.c.l.b16 %v1304
    %v1702 = vunpack.c.h.b16 %v1304
    %v1703 = vunpack.c.l.b16 %v1305
    %v1704 = vunpack.c.h.b16 %v1305
    %v1705 = vunpack.c.l.b16 %v1306
    %v1706 = vunpack.c.h.b16 %v1306
    %v1707 = vunpack.c.l.b16 %v1307
    %v1708 = vunpack.c.h.b16 %v1307
    %v1709 = vunpack.c.l.b16 %v1308
    %v1710 = vunpack.c.h.b16 %v1308
    %v1711 = vunpack.c.l.b16 %v1309
    %v1712 = vunpack.c.h.b16 %v1309
    %v1713 = vunpack.c.l.b16 %v1310
    %v1714 = vunpack.c.h.b16 %v1310
    %v1715 = vunpack.c.l.b16 %v1311
    %v1716 = vunpack.c.h.b16 %v1311
    %v1717 = vpack.c.b16 %v1465, %v1461
    %v1718 = vpack.c.b16 %v1466, %v1462
    %v1719 = vpack.c.b16 %v1467, %v1463
    %v1720 = vpack.c.b16 %v1468, %v1464
    %v1721 = vpack.c.b16 %v1473, %v1469
    %v1722 = vpack.c.b16 %v1474, %v1470
    %v1723 = vpack.c.b16 %v1475, %v1471
    %v1724 = vpack.c.b16 %v1476, %v1472
    %v1725 = vpack.c.b16 %v1481, %v1477
    %v1726 = vpack.c.b16 %v1482, %v1478
    %v1727 = vpack.c.b16 %v1483, %v1479
    %v1728 = vpack.c.b16 %v1484, %v1480
    %v1729 = vpack.c.b16 %v1489, %v1485
    %v1730 = vpack.c.b16 %v1490, %v1486
    %v1731 = vpack.c.b16 %v1491, %v1487
    %v1732 = vpack.c.b16 %v1492, %v1488
    %v1733 = vpack.c.b16 %v1497, %v1493
    %v1734 = vpack.c.b16 %v1498, %v1494
    %v1735 = vpack.c.b16 %v1499, %v1495
    %v1736 = vpack.c.b16 %v1500, %v1496
    %v1737 = vpack.c.b16 %v1505, %v1501
    %v1738 = vpack.c.b16 %v1506, %v1502
    %v1739 = vpack.c.b16 %v1507, %v1503
    %v1740 = vpack.c.b16 %v1508, %v1504
    %v1741 = vpack.c.b16 %v1513, %v1509
    %v1742 = vpack.c.b16 %v1514, %v1510
    %v1743 = vpack.c.b16 %v1515, %v1511
    %v1744 = vpack.c.b16 %v1516, %v1512
    %v1745 = vpack.c.b16 %v1521, %v1517
    %v1746 = vpack.c.b16 %v1522, %v1518
    %v1747 = vpack.c.b16 %v1523, %v1519
    %v1748 = vpack.c.b16 %v1524, %v1520
    %v1749 = vpack.c.b16 %v1529, %v1525
    %v1750 = vpack.c.b16 %v1530, %v1526
    %v1751 = vpack.c.b16 %v1531, %v1527
    %v1752 = vpack.c.b16 %v1532, %v1528
    %v1753 = vpack.c.b16 %v1537, %v1533
    %v1754 = vpack.c.b16 %v1538, %v1534
    %v1755 = vpack.c.b16 %v1539, %v1535
    %v1756 = vpack.c.b16 %v1540, %v1536
    %v1757 = vpack.c.b16 %v1545, %v1541
    %v1758 = vpack.c.b16 %v1546, %v1542
    %v1759 = vpack.c.b16 %v1547, %v1543
    %v1760 = vpack.c.b16 %v1548, %v1544
    %v1761 = vpack.c.b16 %v1553, %v1549
    %v1762 = vpack.c.b16 %v1554, %v1550
    %v1763 = vpack.c.b16 %v1555, %v1551
    %v1764 = vpack.c.b16 %v1556, %v1552
    %v1765 = vpack.c.b16 %v1561, %v1557
    %v1766 = vpack.c.b16 %v1562, %v1558
    %v1767 = vpack.c.b16 %v1563, %v1559
    %v1768 = vpack.c.b16 %v1564, %v1560
    %v1769 = vpack.c.b16 %v1569, %v1565
    %v1770 = vpack.c.b16 %v1570, %v1566
    %v1771 = vpack.c.b16 %v1571, %v1567
    %v1772 = vpack.c.b16 %v1572, %v1568
    %v1773 = vpack.c.b16 %v1577, %v1573
    %v1774 = vpack.c.b16 %v1578, %v1574
    %v1775 = vpack.c.b16 %v1579, %v1575
    %v1776 = vpack.c.b16 %v1580, %v1576
    %v1777 = vpack.c.b16 %v1585, %v1581
    %v1778 = vpack.c.b16 %v1586, %v1582
    %v1779 = vpack.c.b16 %v1587, %v1583
    %v1780 = vpack.c.b16 %v1588, %v1584
    %v1781 = vpack.c.b16 %v1593, %v1589
    %v1782 = vpack.c.b16 %v1594, %v1590
    %v1783 = vpack.c.b16 %v1595, %v1591
    %v1784 = vpack.c.b16 %v1596, %v1592
    %v1785 = vpack.c.b16 %v1601, %v1597
    %v1786 = vpack.c.b16 %v1602, %v1598
    %v1787 = vpack.c.b16 %v1603, %v1599
    %v1788 = vpack.c.b16 %v1604, %v1600
    %v1789 = vpack.c.b16 %v1609, %v1605
    %v1790 = vpack.c.b16 %v1610, %v1606
    %v1791 = vpack.c.b16 %v1611, %v1607
    %v1792 = vpack.c.b16 %v1612, %v1608
    %v1793 = vpack.c.b16 %v1617, %v1613
    %v1794 = vpack.c.b16 %v1618, %v1614
    %v1795 = vpack.c.b16 %v1619, %v1615
    %v1796 = vpack.c.b16 %v1620, %v1616
    %v1797 = vpack.c.b16 %v1625, %v1621
    %v1798 = vpack.c.b16 %v1626, %v1622
    %v1799 = vpack.c.b16 %v1627, %v1623
    %v1800 = vpack.c.b16 %v1628, %v1624
    %v1801 = vpack.c.b16 %v1633, %v1629
    %v1802 = vpack.c.b16 %v1634, %v1630
    %v1803 = vpack.c.b16 %v1635, %v1631
    %v1804 = vpack.c.b16 %v1636, %v1632
    %v1805 = vpack.c.b16 %v1641, %v1637
    %v1806 = vpack.c.b16 %v1642, %v1638
    %v1807 = vpack.c.b16 %v1643, %v1639
    %v1808 = vpack.c.b16 %v1644, %v1640
    %v1809 = vpack.c.b16 %v1649, %v1645
    %v1810 = vpack.c.b16 %v1650, %v1646
    %v1811 = vpack.c.b16 %v1651, %v1647
    %v1812 = vpack.c.b16 %v1652, %v1648
    %v1813 = vpack.c.b16 %v1657, %v1653
    %v1814 = vpack.c.b16 %v1658, %v1654
    %v1815 = vpack.c.b16 %v1659, %v1655
    %v1816 = vpack.c.b16 %v1660, %v1656
    %v1817 = vpack.c.b16 %v1665, %v1661
    %v1818 = vpack.c.b16 %v1666, %v1662
    %v1819 = vpack.c.b16 %v1667, %v1663
    %v1820 = vpack.c.b16 %v1668, %v1664
    %v1821 = vpack.c.b16 %v1673, %v1669
    %v1822 = vpack.c.b16 %v1674, %v1670
    %v1823 = vpack.c.b16 %v1675, %v1671
    %v1824 = vpack.c.b16 %v1676, %v1672
    %v1825 = vpack.c.b16 %v1681, %v1677
    %v1826 = vpack.c.b16 %v1682, %v1678
    %v1827 = vpack.c.b16 %v1683, %v1679
    %v1828 = vpack.c.b16 %v1684, %v1680
    %v1829 = vpack.c.b16 %v1689, %v1685
    %v1830 = vpack.c.b16 %v1690, %v1686
    %v1831 = vpack.c.b16 %v1691, %v1687
    %v1832 = vpack.c.b16 %v1692, %v1688
    %v1833 = vpack.c.b16 %v1697, %v1693
    %v1834 = vpack.c.b16 %v1698, %v1694
    %v1835 = vpack.c.b16 %v1699, %v1695
    %v1836 = vpack.c.b16 %v1700, %v1696
    %v1837 = vpack.c.b16 %v1705, %v1701
    %v1838 = vpack.c.b16 %v1706, %v1702
    %v1839 = vpack.c.b16 %v1707, %v1703
    %v1840 = vpack.c.b16 %v1708, %v1704
    %v1841 = vpack.c.b16 %v1713, %v1709
    %v1842 = vpack.c.b16 %v1714, %v1710
    %v1843 = vpack.c.b16 %v1715, %v1711
    %v1844 = vpack.c.b16 %v1716, %v1712
    %1973 = vmatprep.subr.bf16.mxu0 %v1746
    %1974 = vmatpush1.bf16.msra.mxu0 %v1745
    %1975 = vmatprep.subr.bf16.mxu0 %v1742
    %1976 = vmatpush1.bf16.msra.mxu0 %v1741
    %1977 = vmatprep.subr.bf16.mxu0 %v1738
    %1978 = vmatpush1.bf16.msra.mxu0 %v1737
    %1979 = vmatprep.subr.bf16.mxu0 %v1734
    %1980 = vmatpush1.bf16.msra.mxu0 %v1733
    %1981 = vmatprep.subr.bf16.mxu0 %v1730
    %1982 = vmatpush1.bf16.msra.mxu0 %v1729
    %1983 = vmatprep.subr.bf16.mxu0 %v1726
    %1984 = vmatpush1.bf16.msra.mxu0 %v1725
    %1985 = vmatprep.subr.bf16.mxu0 %v1722
    %1986 = vmatpush1.bf16.msra.mxu0 %v1721
    %1987 = vmatprep.subr.bf16.mxu0 %v1718
    %1988 = vmatpush1.bf16.msra.mxu0 %v1717
    %1989 = vmatprep.subr.bf16.mxu0 %v1778
    %1990 = vmatpush2.bf16.msra.mxu0 %v1777
    %1991 = vmatprep.subr.bf16.mxu0 %v1774
    %1992 = vmatpush2.bf16.msra.mxu0 %v1773
    %1993 = vmatprep.subr.bf16.mxu0 %v1770
    %1994 = vmatpush2.bf16.msra.mxu0 %v1769
    %1995 = vmatprep.subr.bf16.mxu0 %v1766
    %1996 = vmatpush2.bf16.msra.mxu0 %v1765
    %1997 = vmatprep.subr.bf16.mxu0 %v1762
    %1998 = vmatpush2.bf16.msra.mxu0 %v1761
    %1999 = vmatprep.subr.bf16.mxu0 %v1758
    %2000 = vmatpush2.bf16.msra.mxu0 %v1757
    %2001 = vmatprep.subr.bf16.mxu0 %v1754
    %2002 = vmatpush2.bf16.msra.mxu0 %v1753
    %2003 = vmatprep.subr.bf16.mxu0 %v1750
    %2004 = vmatpush2.bf16.msra.mxu0 %v1749
    %2005 = vmatprep.mubr.bf16.mxu0 %v1181
    %2006 = vmatmul.mubr.bf16.gmra.mxu0 %v1180
    %v2007 = vpop.f32.mrf.mxu0
    %v2008 = vadd.f32 %v1316, %v2007
    %v2009 = vpop.f32.mrf.mxu0
    %v2010 = vadd.f32 %v1320, %v2009
    %v2011 = vpop.f32.mrf.mxu0
    %v2012 = vpop.f32.mrf.mxu0
    %2013 = vdwg.mxu0
    %2014 = vmatprep.subr.bf16.mxu0 %v1810
    %2015 = vmatpush1.bf16.msra.mxu0 %v1809
    %2016 = vmatprep.subr.bf16.mxu0 %v1806
    %2017 = vmatpush1.bf16.msra.mxu0 %v1805
    %2018 = vmatprep.subr.bf16.mxu0 %v1802
    %2019 = vmatpush1.bf16.msra.mxu0 %v1801
    %2020 = vmatprep.subr.bf16.mxu0 %v1798
    %2021 = vmatpush1.bf16.msra.mxu0 %v1797
    %2022 = vmatprep.subr.bf16.mxu0 %v1794
    %2023 = vmatpush1.bf16.msra.mxu0 %v1793
    %2024 = vmatprep.subr.bf16.mxu0 %v1790
    %2025 = vmatpush1.bf16.msra.mxu0 %v1789
    %2026 = vmatprep.subr.bf16.mxu0 %v1786
    %2027 = vmatpush1.bf16.msra.mxu0 %v1785
    %2028 = vmatprep.subr.bf16.mxu0 %v1782
    %2029 = vmatpush1.bf16.msra.mxu0 %v1781
    %2030 = vmatprep.subr.bf16.mxu0 %v1842
    %2031 = vmatpush2.bf16.msra.mxu0 %v1841
    %2032 = vmatprep.subr.bf16.mxu0 %v1838
    %2033 = vmatpush2.bf16.msra.mxu0 %v1837
    %2034 = vmatprep.subr.bf16.mxu0 %v1834
    %2035 = vmatpush2.bf16.msra.mxu0 %v1833
    %2036 = vmatprep.subr.bf16.mxu0 %v1830
    %2037 = vmatpush2.bf16.msra.mxu0 %v1829
    %2038 = vmatprep.subr.bf16.mxu0 %v1826
    %2039 = vmatpush2.bf16.msra.mxu0 %v1825
    %2040 = vmatprep.subr.bf16.mxu0 %v1822
    %2041 = vmatpush2.bf16.msra.mxu0 %v1821
    %2042 = vmatprep.subr.bf16.mxu0 %v1818
    %2043 = vmatpush2.bf16.msra.mxu0 %v1817
    %2044 = vmatprep.subr.bf16.mxu0 %v1814
    %2045 = vmatpush2.bf16.msra.mxu0 %v1813
    %2046 = vmatprep.mubr.bf16.mxu0 %v1183
    %2047 = vmatmul.mubr.bf16.gmra.mxu0 %v1182
    %v2048 = vpop.f32.mrf.mxu0
    %v2049 = vadd.f32 %v2008, %v2048
    %v2050 = vpop.f32.mrf.mxu0
    %v2051 = vadd.f32 %v2010, %v2050
    %v2052 = vpop.f32.mrf.mxu0
    %v2053 = vpop.f32.mrf.mxu0
    %2054 = vdwg.mxu0
    %2055 = vmatprep.subr.bf16.mxu0 %v1748
    %2056 = vmatpush1.bf16.msra.mxu0 %v1747
    %2057 = vmatprep.subr.bf16.mxu0 %v1744
    %2058 = vmatpush1.bf16.msra.mxu0 %v1743
    %2059 = vmatprep.subr.bf16.mxu0 %v1740
    %2060 = vmatpush1.bf16.msra.mxu0 %v1739
    %2061 = vmatprep.subr.bf16.mxu0 %v1736
    %2062 = vmatpush1.bf16.msra.mxu0 %v1735
    %2063 = vmatprep.subr.bf16.mxu0 %v1732
    %2064 = vmatpush1.bf16.msra.mxu0 %v1731
    %2065 = vmatprep.subr.bf16.mxu0 %v1728
    %2066 = vmatpush1.bf16.msra.mxu0 %v1727
    %2067 = vmatprep.subr.bf16.mxu0 %v1724
    %2068 = vmatpush1.bf16.msra.mxu0 %v1723
    %2069 = vmatprep.subr.bf16.mxu0 %v1720
    %2070 = vmatpush1.bf16.msra.mxu0 %v1719
    %2071 = vmatprep.subr.bf16.mxu0 %v1780
    %2072 = vmatpush2.bf16.msra.mxu0 %v1779
    %2073 = vmatprep.subr.bf16.mxu0 %v1776
    %2074 = vmatpush2.bf16.msra.mxu0 %v1775
    %2075 = vmatprep.subr.bf16.mxu0 %v1772
    %2076 = vmatpush2.bf16.msra.mxu0 %v1771
    %2077 = vmatprep.subr.bf16.mxu0 %v1768
    %2078 = vmatpush2.bf16.msra.mxu0 %v1767
    %2079 = vmatprep.subr.bf16.mxu0 %v1764
    %2080 = vmatpush2.bf16.msra.mxu0 %v1763
    %2081 = vmatprep.subr.bf16.mxu0 %v1760
    %2082 = vmatpush2.bf16.msra.mxu0 %v1759
    %2083 = vmatprep.subr.bf16.mxu0 %v1756
    %2084 = vmatpush2.bf16.msra.mxu0 %v1755
    %2085 = vmatprep.subr.bf16.mxu0 %v1752
    %2086 = vmatpush2.bf16.msra.mxu0 %v1751
    %2087 = vmatprep.mubr.bf16.mxu0 %v1181
    %2088 = vmatmul.mubr.bf16.gmra.mxu0 %v1180
    %v2089 = vpop.f32.mrf.mxu0
    %v2090 = vadd.f32 %v1324, %v2089
    %v2091 = vpop.f32.mrf.mxu0
    %v2092 = vadd.f32 %v1328, %v2091
    %v2093 = vpop.f32.mrf.mxu0
    %v2094 = vpop.f32.mrf.mxu0
    %2095 = vdwg.mxu0
    %2096 = vmatprep.subr.bf16.mxu0 %v1812
    %2097 = vmatpush1.bf16.msra.mxu0 %v1811
    %2098 = vmatprep.subr.bf16.mxu0 %v1808
    %2099 = vmatpush1.bf16.msra.mxu0 %v1807
    %2100 = vmatprep.subr.bf16.mxu0 %v1804
    %2101 = vmatpush1.bf16.msra.mxu0 %v1803
    %2102 = vmatprep.subr.bf16.mxu0 %v1800
    %2103 = vmatpush1.bf16.msra.mxu0 %v1799
    %2104 = vmatprep.subr.bf16.mxu0 %v1796
    %2105 = vmatpush1.bf16.msra.mxu0 %v1795
    %2106 = vmatprep.subr.bf16.mxu0 %v1792
    %2107 = vmatpush1.bf16.msra.mxu0 %v1791
    %2108 = vmatprep.subr.bf16.mxu0 %v1788
    %2109 = vmatpush1.bf16.msra.mxu0 %v1787
    %2110 = vmatprep.subr.bf16.mxu0 %v1784
    %2111 = vmatpush1.bf16.msra.mxu0 %v1783
    %2112 = vmatprep.subr.bf16.mxu0 %v1844
    %2113 = vmatpush2.bf16.msra.mxu0 %v1843
    %2114 = vmatprep.subr.bf16.mxu0 %v1840
    %2115 = vmatpush2.bf16.msra.mxu0 %v1839
    %2116 = vmatprep.subr.bf16.mxu0 %v1836
    %2117 = vmatpush2.bf16.msra.mxu0 %v1835
    %2118 = vmatprep.subr.bf16.mxu0 %v1832
    %2119 = vmatpush2.bf16.msra.mxu0 %v1831
    %2120 = vmatprep.subr.bf16.mxu0 %v1828
    %2121 = vmatpush2.bf16.msra.mxu0 %v1827
    %2122 = vmatprep.subr.bf16.mxu0 %v1824
    %2123 = vmatpush2.bf16.msra.mxu0 %v1823
    %2124 = vmatprep.subr.bf16.mxu0 %v1820
    %2125 = vmatpush2.bf16.msra.mxu0 %v1819
    %2126 = vmatprep.subr.bf16.mxu0 %v1816
    %2127 = vmatpush2.bf16.msra.mxu0 %v1815
    %2128 = vmatprep.mubr.bf16.mxu0 %v1183
    %2129 = vmatmul.mubr.bf16.gmra.mxu0 %v1182
    %v2130 = vpop.f32.mrf.mxu0
    %v2131 = vadd.f32 %v2090, %v2130
    %v2132 = vpop.f32.mrf.mxu0
    %v2133 = vadd.f32 %v2092, %v2132
    %v2134 = vpop.f32.mrf.mxu0
    %v2135 = vpop.f32.mrf.mxu0
    %2136 = vdwg.mxu0
    %v2137 = vmax.f32 %v2049, 0.0
    %v2138 = vmax.f32 %v2051, 0.0
    %v2139 = vmax.f32 %v2131, 0.0
    %v2140 = vmax.f32 %v2133, 0.0
    %v2141 = vpack.c.bf16 %v2137, %v2137
    %v2142 = vpack.c.bf16 %v2138, %v2138
    %v2143 = vpack.c.bf16 %v2139, %v2139
    %v2144 = vpack.c.bf16 %v2140, %v2140
    %v2145 = vld [vmem:[%s3] sm:$0xf]
    %v2146 = vld [vmem:[%s3 + $0x4] sm:$0xf]
    %v2147 = vld [vmem:[%s3 + $0x8] sm:$0xf]
    %v2148 = vld [vmem:[%s3 + $0xc] sm:$0xf]
    %v2149 = vld [vmem:[%s3 + $0x10] sm:$0xf]
    %v2150 = vld [vmem:[%s3 + $0x14] sm:$0xf]
    %v2151 = vld [vmem:[%s3 + $0x18] sm:$0xf]
    %v2152 = vld [vmem:[%s3 + $0x1c] sm:$0xf]
    %v2153 = vld [vmem:[%s3 + $0x20] sm:$0xf]
    %v2154 = vld [vmem:[%s3 + $0x24] sm:$0xf]
    %v2155 = vld [vmem:[%s3 + $0x28] sm:$0xf]
    %v2156 = vld [vmem:[%s3 + $0x2c] sm:$0xf]
    %v2157 = vld [vmem:[%s3 + $0x30] sm:$0xf]
    %v2158 = vld [vmem:[%s3 + $0x34] sm:$0xf]
    %v2159 = vld [vmem:[%s3 + $0x38] sm:$0xf]
    %v2160 = vld [vmem:[%s3 + $0x3c] sm:$0xf]
    %v2161 = vld [vmem:[%s3 + $0x40] sm:$0xf]
    %v2162 = vld [vmem:[%s3 + $0x44] sm:$0xf]
    %v2163 = vld [vmem:[%s3 + $0x48] sm:$0xf]
    %v2164 = vld [vmem:[%s3 + $0x4c] sm:$0xf]
    %v2165 = vld [vmem:[%s3 + $0x50] sm:$0xf]
    %v2166 = vld [vmem:[%s3 + $0x54] sm:$0xf]
    %v2167 = vld [vmem:[%s3 + $0x58] sm:$0xf]
    %v2168 = vld [vmem:[%s3 + $0x5c] sm:$0xf]
    %v2169 = vld [vmem:[%s3 + $0x60] sm:$0xf]
    %v2170 = vld [vmem:[%s3 + $0x64] sm:$0xf]
    %v2171 = vld [vmem:[%s3 + $0x68] sm:$0xf]
    %v2172 = vld [vmem:[%s3 + $0x6c] sm:$0xf]
    %v2173 = vld [vmem:[%s3 + $0x70] sm:$0xf]
    %v2174 = vld [vmem:[%s3 + $0x74] sm:$0xf]
    %v2175 = vld [vmem:[%s3 + $0x78] sm:$0xf]
    %v2176 = vld [vmem:[%s3 + $0x7c] sm:$0xf]
    %v2177 = vld [vmem:[%s3 + $0x80] sm:$0xf]
    %v2178 = vld [vmem:[%s3 + $0x84] sm:$0xf]
    %v2179 = vld [vmem:[%s3 + $0x88] sm:$0xf]
    %v2180 = vld [vmem:[%s3 + $0x8c] sm:$0xf]
    %v2181 = vld [vmem:[%s3 + $0x90] sm:$0xf]
    %v2182 = vld [vmem:[%s3 + $0x94] sm:$0xf]
    %v2183 = vld [vmem:[%s3 + $0x98] sm:$0xf]
    %v2184 = vld [vmem:[%s3 + $0x9c] sm:$0xf]
    %v2185 = vld [vmem:[%s3 + $0xa0] sm:$0xf]
    %v2186 = vld [vmem:[%s3 + $0xa4] sm:$0xf]
    %v2187 = vld [vmem:[%s3 + $0xa8] sm:$0xf]
    %v2188 = vld [vmem:[%s3 + $0xac] sm:$0xf]
    %v2189 = vld [vmem:[%s3 + $0xb0] sm:$0xf]
    %v2190 = vld [vmem:[%s3 + $0xb4] sm:$0xf]
    %v2191 = vld [vmem:[%s3 + $0xb8] sm:$0xf]
    %v2192 = vld [vmem:[%s3 + $0xbc] sm:$0xf]
    %v2193 = vld [vmem:[%s3 + $0xc0] sm:$0xf]
    %v2194 = vld [vmem:[%s3 + $0xc4] sm:$0xf]
    %v2195 = vld [vmem:[%s3 + $0xc8] sm:$0xf]
    %v2196 = vld [vmem:[%s3 + $0xcc] sm:$0xf]
    %v2197 = vld [vmem:[%s3 + $0xd0] sm:$0xf]
    %v2198 = vld [vmem:[%s3 + $0xd4] sm:$0xf]
    %v2199 = vld [vmem:[%s3 + $0xd8] sm:$0xf]
    %v2200 = vld [vmem:[%s3 + $0xdc] sm:$0xf]
    %v2201 = vld [vmem:[%s3 + $0xe0] sm:$0xf]
    %v2202 = vld [vmem:[%s3 + $0xe4] sm:$0xf]
    %v2203 = vld [vmem:[%s3 + $0xe8] sm:$0xf]
    %v2204 = vld [vmem:[%s3 + $0xec] sm:$0xf]
    %v2205 = vld [vmem:[%s3 + $0xf0] sm:$0xf]
    %v2206 = vld [vmem:[%s3 + $0xf4] sm:$0xf]
    %v2207 = vld [vmem:[%s3 + $0xf8] sm:$0xf]
    %v2208 = vld [vmem:[%s3 + $0xfc] sm:$0xf]
    %v2273 = vunpack.c.l.b16 %v2145
    %v2274 = vunpack.c.l.b16 %v2146
    %v2275 = vunpack.c.l.b16 %v2147
    %v2276 = vunpack.c.l.b16 %v2148
    %v2277 = vunpack.c.l.b16 %v2149
    %v2278 = vunpack.c.l.b16 %v2150
    %v2279 = vunpack.c.l.b16 %v2151
    %v2280 = vunpack.c.l.b16 %v2152
    %v2281 = vunpack.c.l.b16 %v2153
    %v2282 = vunpack.c.l.b16 %v2154
    %v2283 = vunpack.c.l.b16 %v2155
    %v2284 = vunpack.c.l.b16 %v2156
    %v2285 = vunpack.c.l.b16 %v2157
    %v2286 = vunpack.c.l.b16 %v2158
    %v2287 = vunpack.c.l.b16 %v2159
    %v2288 = vunpack.c.l.b16 %v2160
    %v2289 = vunpack.c.l.b16 %v2161
    %v2290 = vunpack.c.l.b16 %v2162
    %v2291 = vunpack.c.l.b16 %v2163
    %v2292 = vunpack.c.l.b16 %v2164
    %v2293 = vunpack.c.l.b16 %v2165
    %v2294 = vunpack.c.l.b16 %v2166
    %v2295 = vunpack.c.l.b16 %v2167
    %v2296 = vunpack.c.l.b16 %v2168
    %v2297 = vunpack.c.l.b16 %v2169
    %v2298 = vunpack.c.l.b16 %v2170
    %v2299 = vunpack.c.l.b16 %v2171
    %v2300 = vunpack.c.l.b16 %v2172
    %v2301 = vunpack.c.l.b16 %v2173
    %v2302 = vunpack.c.l.b16 %v2174
    %v2303 = vunpack.c.l.b16 %v2175
    %v2304 = vunpack.c.l.b16 %v2176
    %v2305 = vunpack.c.l.b16 %v2177
    %v2306 = vunpack.c.l.b16 %v2178
    %v2307 = vunpack.c.l.b16 %v2179
    %v2308 = vunpack.c.l.b16 %v2180
    %v2309 = vunpack.c.l.b16 %v2181
    %v2310 = vunpack.c.l.b16 %v2182
    %v2311 = vunpack.c.l.b16 %v2183
    %v2312 = vunpack.c.l.b16 %v2184
    %v2313 = vunpack.c.l.b16 %v2185
    %v2314 = vunpack.c.l.b16 %v2186
    %v2315 = vunpack.c.l.b16 %v2187
    %v2316 = vunpack.c.l.b16 %v2188
    %v2317 = vunpack.c.l.b16 %v2189
    %v2318 = vunpack.c.l.b16 %v2190
    %v2319 = vunpack.c.l.b16 %v2191
    %v2320 = vunpack.c.l.b16 %v2192
    %v2321 = vunpack.c.l.b16 %v2193
    %v2322 = vunpack.c.l.b16 %v2194
    %v2323 = vunpack.c.l.b16 %v2195
    %v2324 = vunpack.c.l.b16 %v2196
    %v2325 = vunpack.c.l.b16 %v2197
    %v2326 = vunpack.c.l.b16 %v2198
    %v2327 = vunpack.c.l.b16 %v2199
    %v2328 = vunpack.c.l.b16 %v2200
    %v2329 = vunpack.c.l.b16 %v2201
    %v2330 = vunpack.c.l.b16 %v2202
    %v2331 = vunpack.c.l.b16 %v2203
    %v2332 = vunpack.c.l.b16 %v2204
    %v2333 = vunpack.c.l.b16 %v2205
    %v2334 = vunpack.c.l.b16 %v2206
    %v2335 = vunpack.c.l.b16 %v2207
    %v2336 = vunpack.c.l.b16 %v2208
    %v2337 = vpack.c.b16 %v2274, %v2273
    %v2338 = vpack.c.b16 %v2276, %v2275
    %v2339 = vpack.c.b16 %v2278, %v2277
    %v2340 = vpack.c.b16 %v2280, %v2279
    %v2341 = vpack.c.b16 %v2282, %v2281
    %v2342 = vpack.c.b16 %v2284, %v2283
    %v2343 = vpack.c.b16 %v2286, %v2285
    %v2344 = vpack.c.b16 %v2288, %v2287
    %v2345 = vpack.c.b16 %v2290, %v2289
    %v2346 = vpack.c.b16 %v2292, %v2291
    %v2347 = vpack.c.b16 %v2294, %v2293
    %v2348 = vpack.c.b16 %v2296, %v2295
    %v2349 = vpack.c.b16 %v2298, %v2297
    %v2350 = vpack.c.b16 %v2300, %v2299
    %v2351 = vpack.c.b16 %v2302, %v2301
    %v2352 = vpack.c.b16 %v2304, %v2303
    %v2353 = vpack.c.b16 %v2306, %v2305
    %v2354 = vpack.c.b16 %v2308, %v2307
    %v2355 = vpack.c.b16 %v2310, %v2309
    %v2356 = vpack.c.b16 %v2312, %v2311
    %v2357 = vpack.c.b16 %v2314, %v2313
    %v2358 = vpack.c.b16 %v2316, %v2315
    %v2359 = vpack.c.b16 %v2318, %v2317
    %v2360 = vpack.c.b16 %v2320, %v2319
    %v2361 = vpack.c.b16 %v2322, %v2321
    %v2362 = vpack.c.b16 %v2324, %v2323
    %v2363 = vpack.c.b16 %v2326, %v2325
    %v2364 = vpack.c.b16 %v2328, %v2327
    %v2365 = vpack.c.b16 %v2330, %v2329
    %v2366 = vpack.c.b16 %v2332, %v2331
    %v2367 = vpack.c.b16 %v2334, %v2333
    %v2368 = vpack.c.b16 %v2336, %v2335
    %2401 = vmatprep.subr.bf16.mxu0 0
    %2402 = vmatpush1.bf16.msra.mxu0 %v2344
    %2403 = vmatprep.subr.bf16.mxu0 0
    %2404 = vmatpush1.bf16.msra.mxu0 %v2343
    %2405 = vmatprep.subr.bf16.mxu0 0
    %2406 = vmatpush1.bf16.msra.mxu0 %v2342
    %2407 = vmatprep.subr.bf16.mxu0 0
    %2408 = vmatpush1.bf16.msra.mxu0 %v2341
    %2409 = vmatprep.subr.bf16.mxu0 0
    %2410 = vmatpush1.bf16.msra.mxu0 %v2340
    %2411 = vmatprep.subr.bf16.mxu0 0
    %2412 = vmatpush1.bf16.msra.mxu0 %v2339
    %2413 = vmatprep.subr.bf16.mxu0 0
    %2414 = vmatpush1.bf16.msra.mxu0 %v2338
    %2415 = vmatprep.subr.bf16.mxu0 0
    %2416 = vmatpush1.bf16.msra.mxu0 %v2337
    %2417 = vmatprep.subr.bf16.mxu0 0
    %2418 = vmatpush2.bf16.msra.mxu0 %v2352
    %2419 = vmatprep.subr.bf16.mxu0 0
    %2420 = vmatpush2.bf16.msra.mxu0 %v2351
    %2421 = vmatprep.subr.bf16.mxu0 0
    %2422 = vmatpush2.bf16.msra.mxu0 %v2350
    %2423 = vmatprep.subr.bf16.mxu0 0
    %2424 = vmatpush2.bf16.msra.mxu0 %v2349
    %2425 = vmatprep.subr.bf16.mxu0 0
    %2426 = vmatpush2.bf16.msra.mxu0 %v2348
    %2427 = vmatprep.subr.bf16.mxu0 0
    %2428 = vmatpush2.bf16.msra.mxu0 %v2347
    %2429 = vmatprep.subr.bf16.mxu0 0
    %2430 = vmatpush2.bf16.msra.mxu0 %v2346
    %2431 = vmatprep.subr.bf16.mxu0 0
    %2432 = vmatpush2.bf16.msra.mxu0 %v2345
    %2433 = vmatprep.mubr.bf16.mxu0 %v2142
    %2434 = vmatmul.mubr.bf16.gmra.mxu0 %v2141
    %v2435 = vpop.f32.mrf.mxu0
    %v2436 = vadd.f32 %v47, %v2435
    %v2437 = vpop.f32.mrf.mxu0
    %v2438 = vpop.f32.mrf.mxu0
    %v2439 = vpop.f32.mrf.mxu0
    %2440 = vdwg.mxu0
    %2441 = vmatprep.subr.bf16.mxu0 0
    %2442 = vmatpush1.bf16.msra.mxu0 %v2360
    %2443 = vmatprep.subr.bf16.mxu0 0
    %2444 = vmatpush1.bf16.msra.mxu0 %v2359
    %2445 = vmatprep.subr.bf16.mxu0 0
    %2446 = vmatpush1.bf16.msra.mxu0 %v2358
    %2447 = vmatprep.subr.bf16.mxu0 0
    %2448 = vmatpush1.bf16.msra.mxu0 %v2357
    %2449 = vmatprep.subr.bf16.mxu0 0
    %2450 = vmatpush1.bf16.msra.mxu0 %v2356
    %2451 = vmatprep.subr.bf16.mxu0 0
    %2452 = vmatpush1.bf16.msra.mxu0 %v2355
    %2453 = vmatprep.subr.bf16.mxu0 0
    %2454 = vmatpush1.bf16.msra.mxu0 %v2354
    %2455 = vmatprep.subr.bf16.mxu0 0
    %2456 = vmatpush1.bf16.msra.mxu0 %v2353
    %2457 = vmatprep.subr.bf16.mxu0 0
    %2458 = vmatpush2.bf16.msra.mxu0 %v2368
    %2459 = vmatprep.subr.bf16.mxu0 0
    %2460 = vmatpush2.bf16.msra.mxu0 %v2367
    %2461 = vmatprep.subr.bf16.mxu0 0
    %2462 = vmatpush2.bf16.msra.mxu0 %v2366
    %2463 = vmatprep.subr.bf16.mxu0 0
    %2464 = vmatpush2.bf16.msra.mxu0 %v2365
    %2465 = vmatprep.subr.bf16.mxu0 0
    %2466 = vmatpush2.bf16.msra.mxu0 %v2364
    %2467 = vmatprep.subr.bf16.mxu0 0
    %2468 = vmatpush2.bf16.msra.mxu0 %v2363
    %2469 = vmatprep.subr.bf16.mxu0 0
    %2470 = vmatpush2.bf16.msra.mxu0 %v2362
    %2471 = vmatprep.subr.bf16.mxu0 0
    %2472 = vmatpush2.bf16.msra.mxu0 %v2361
    %2473 = vmatprep.mubr.bf16.mxu0 %v2144
    %2474 = vmatmul.mubr.bf16.gmra.mxu0 %v2143
    %v2475 = vpop.f32.mrf.mxu0
    %v2476 = vadd.f32 %v2436, %v2475
    %v2477 = vpop.f32.mrf.mxu0
    %v2478 = vpop.f32.mrf.mxu0
    %v2479 = vpop.f32.mrf.mxu0
    %2480 = vdwg.mxu0
    %v2481 = vmul.f32 %v2476, 1.442695
    %v2482 = vpow.pop %v2481
    %2483 = vst.msk [vmem:[#allocation5] sm:$0xff] %vm69, %v2482
    %v2484 = vmul.f32 %v36, %v2476
    %v2485 = vsub.f32 %v2484, %v2482
    %v2486 = vsel %vm69, %v2485, 0.0
    %2487 = vadd.xlane.f32.xlu0 %v2486
    %v2488 = vpop.xlane.xlu0 %2487
    %v2489 = vrot.slane %v2488, 4
    %v2490 = vadd.f32 %v2488, %v2489
    %v2491 = vrot.slane %v2490, 2
    %v2492 = vadd.f32 %v2490, %v2491
    %v2493 = vrot.slane %v2492, 1
    %v2494 = vadd.f32 %v2492, %v2493
    %vm2495 = vcmask 0
    %2496 = vst.msk [vmem:[#allocation6] sm:$0x1] %vm2495, %v2494
    // Predicated region
    $region22: #{forward.1} parent=1 // pred_check
      _
    $region23: #{forward.1} parent=1 // pred_check_branch
      %2498 = sbr.rel (0) target = $region25
    $region24: #{forward.1} parent=1 // pred_region
      %s2500 = ssub.s32 128, 128
      %2501 = vsyncadd [#allocation4], %s2500
      %s2503 = sshll.u32 [#allocation5], 4
      %s2504 = int_to_ptr.vmem [resolvable:$true] %s2503
      %2506 = dma.vmem_to_hbm [thread:$0]  %s2504, 128, %s4, [#allocation4]
    $region25: #{forward.1} parent=1 // pred_fallthru
      _
    // Predicated region
    $region26: #{forward.1} parent=1 // pred_check
      _
    $region27: #{forward.1} parent=1 // pred_check_branch
      %2508 = sbr.rel (0) target = $region29
    $region28: #{forward.1} parent=1 // pred_region
      %s2510 = ssub.s32 16, 16
      %2511 = vsyncadd [#allocation7], %s2510
      %s2513 = sshll.u32 [#allocation6], 4
      %s2514 = int_to_ptr.vmem [resolvable:$true] %s2513
      %2516 = dma.vmem_to_hbm [thread:$0]  %s2514, 16, %s5, [#allocation7]
    $region29: #{forward.1} parent=1 // pred_fallthru
      _
    // Predicated region
    $region30: #{forward.1} parent=1 // pred_check
      _
    $region31: #{forward.1} parent=1 // pred_check_branch
      %2518 = sbr.rel (0) target = $region33
    $region32: #{forward.1} parent=1 // pred_region
      %2519 = dma.done [#allocation4], 128
    $region33: #{forward.1} parent=1 // pred_fallthru
      _
    // Predicated region
    $region34: #{forward.1} parent=1 // pred_check
      _
    $region35: #{forward.1} parent=1 // pred_check_branch
      %2521 = sbr.rel (0) target = $region37
    $region36: #{forward.1} parent=1 // pred_region
      %2522 = dma.done [#allocation7], 16
    $region37: #{forward.1} parent=1 // pred_fallthru
      _
    %2523 = vsyncpa [#allocation3], 1
    %2524 = vsyncpa [#allocation4], 1
    %2525 = vsyncpa [#allocation7], 1

</llo_original>
